<compile_context>
chip_gen: v5e
topology: v5e:2x2
jax: 0.10.0
libtpu: 0.0.40
codegen_flags: <defaults>
</compile_context>

<pallas_src>
import functools
import math

import jax
import jax.numpy as jnp
from jax.experimental import pallas as pl
from jax.experimental.pallas import tpu as pltpu


# ----------------------------------------------------------------------------
# Fused per-stage kernel
# ----------------------------------------------------------------------------
# Kernel tile layout: channels in sublanes, spatial positions in lanes.
# refs, in order:
#   enc (1,C,T) [, prev (1,C,T)], eps (1,L,T) [, pw (2L,C), pb (2L,1)],
#   qw (2L,C), qb (2L,1), dw (C,L), db (C,1),
#   out (1,outC,T), z (1,L,T), kl (1,L,T) [, pmu (1,L,T), psig (1,L,T)],
#   qmu (1,L,T), qsig (1,L,T)
def _fused_stage_kernel(*refs, latent_dim, num_channels, has_prior, has_prev):
    L, C = latent_dim, num_channels

    it = iter(refs)
    enc_ref = next(it)
    prev_ref = next(it) if has_prev else None
    eps_ref = next(it)
    if has_prior:
        pw_ref, pb_ref = next(it), next(it)
    qw_ref, qb_ref = next(it), next(it)
    dw_ref, db_ref = next(it), next(it)
    out_ref, z_ref, kl_ref = next(it), next(it), next(it)
    if has_prior:
        pmu_ref, psig_ref = next(it), next(it)
    qmu_ref, qsig_ref = next(it), next(it)

    def encode(x, w_ref, b_ref):
        """LayerNorm over channels -> SiLU -> 1x1 conv -> (mu, log_var)."""
        xf = x.astype(jnp.float32)
        mean = jnp.mean(xf, axis=0, keepdims=True)
        var = jnp.mean(jnp.square(xf - mean), axis=0, keepdims=True)
        xn = (xf - mean) * jax.lax.rsqrt(var + 1e-5)
        h = xn * jax.nn.sigmoid(xn)                       # SiLU
        y = jnp.dot(w_ref[...], h,
                    preferred_element_type=jnp.float32) + b_ref[...]
        return y[:L, :], y[L:, :]                         # mu, log_var

    enc = enc_ref[0]
    prev = prev_ref[0] if has_prev else None

    # --- prior estimator (statically skipped for the last stage) ------------
    if has_prior:
        pmu, plv = encode(prev, pw_ref, pb_ref)
        psig = jnp.exp(0.5 * plv)
        pmu_ref[0] = pmu
        psig_ref[0] = psig

    # --- posterior encoder (residual parameterization against the prior) ----
    qmu, qlv = encode(enc, qw_ref, qb_ref)
    if has_prior:
        qmu = qmu + pmu
        qlv = qlv + plv
    qsig = jnp.exp(0.5 * qlv)
    qmu_ref[0] = qmu
    qsig_ref[0] = qsig

    # --- reparameterized sample (eps streamed in, generated host-side) ------
    z = qmu + qsig * eps_ref[0]
    z_ref[0] = z

    # --- element-wise KL(q || p) straight from the log-variances ------------
    if has_prior:
        kl = (0.5 * (plv - qlv)
              + (jnp.square(qsig) + jnp.square(qmu - pmu))
              * (0.5 * jnp.exp(-plv))
              - 0.5)
    else:  # prior is the standard normal N(0, 1)
        kl = 0.5 * (jnp.square(qsig) + jnp.square(qmu) - 1.0 - qlv)
    kl_ref[0] = kl

    # --- latent decoder (SiLU -> 1x1 conv) + fused channel concat -----------
    hz = z * jax.nn.sigmoid(z)
    dec = jnp.dot(dw_ref[...], hz,
                  preferred_element_type=jnp.float32) + db_ref[...]
    if has_prev:
        out_ref[0, 0:C, :] = dec          # torch.cat((decoded, prev), dim=1)
        out_ref[0, C:2 * C, :] = prev
    else:
        out_ref[0] = dec


# ----------------------------------------------------------------------------
# Wrapper (tiling / BlockSpecs / pallas_call)
# ----------------------------------------------------------------------------
def _choose_spatial_tile(s, cap=1024):
    """Largest multiple of 128 dividing s, capped (VMEM-friendly incl. v7x);
    falls back to the full extent when no multiple-of-128 divisor exists."""
    if s % 128 != 0:
        return s
    t = min(cap, s)
    t -= t % 128
    while s % t:
        t -= 128
    return t


def _run_fused_stage(enc_p, dec_p, prior_p, encoding, prev, eps_key):
    n, c, h, w = encoding.shape
    s = h * w
    latent_dim = enc_p["w"].shape[0] // 2
    has_prior = prior_p is not None
    has_prev = prev is not None
    if has_prior and not has_prev:
        raise ValueError("prior estimator requires previous_decoder_output")

    tile_s = _choose_spatial_tile(s)
    grid = (n, s // tile_s)

    def data_spec(ch):
        return pl.BlockSpec((1, ch, tile_s), lambda i, j: (i, 0, j))

    def weight_spec(arr):
        return pl.BlockSpec(arr.shape, lambda i, j: (0, 0))

    # Host-side eps (cheap, fully fused by XLA); kernel stays portable.
    eps = jax.random.normal(eps_key, (n, latent_dim, s), jnp.float32)

    # Free reshapes only (no transposes): NCHW -> (N, C, H*W).
    inputs = [encoding.reshape(n, c, s).astype(jnp.float32)]
    in_specs = [data_spec(c)]
    if has_prev:
        inputs.append(prev.reshape(n, c, s).astype(jnp.float32))
        in_specs.append(data_spec(c))
    inputs.append(eps)
    in_specs.append(data_spec(latent_dim))
    if has_prior:
        inputs += [prior_p["w"], prior_p["b"]]
        in_specs += [weight_spec(prior_p["w"]), weight_spec(prior_p["b"])]
    inputs += [enc_p["w"], enc_p["b"], dec_p["w"], dec_p["b"]]
    in_specs += [weight_spec(enc_p["w"]), weight_spec(enc_p["b"]),
                 weight_spec(dec_p["w"]), weight_spec(dec_p["b"])]

    out_c = 2 * c if has_prev else c
    lat = jax.ShapeDtypeStruct((n, latent_dim, s), jnp.float32)
    out_shapes = [jax.ShapeDtypeStruct((n, out_c, s), jnp.float32), lat, lat]
    out_specs = [data_spec(out_c), data_spec(latent_dim), data_spec(latent_dim)]
    if has_prior:
        out_shapes += [lat, lat]
        out_specs += [data_spec(latent_dim), data_spec(latent_dim)]
    out_shapes += [lat, lat]
    out_specs += [data_spec(latent_dim), data_spec(latent_dim)]

    # Rough cost hint so XLA schedules around this (mem-bound) custom call.
    bytes_accessed = 4 * (sum(int(x.size) for x in inputs)
                          + sum(int(math.prod(o.shape)) for o in out_shapes))
    n_enc = 2 if has_prior else 1
    cost = pl.CostEstimate(
        flops=int(2 * n * s * c * 2 * latent_dim * n_enc
                  + 2 * n * s * latent_dim * c
                  + 30 * n * s * (c + latent_dim)),
        transcendentals=int(n * s * (c * n_enc + 6 * latent_dim)),
        bytes_accessed=int(bytes_accessed),
    )

    kernel = functools.partial(
        _fused_stage_kernel, latent_dim=latent_dim, num_channels=c,
        has_prior=has_prior, has_prev=has_prev)

    results = pl.pallas_call(
        kernel,
        out_shape=tuple(out_shapes),
        grid_spec=pltpu.PrefetchScalarGridSpec(
            num_scalar_prefetch=0,
            grid=grid,
            in_specs=in_specs,
            out_specs=tuple(out_specs),
        ),
        compiler_params=pltpu.CompilerParams(
            dimension_semantics=("parallel", "parallel")),
        cost_estimate=cost,
    )(*inputs)

    out3, z3, kl3 = results[0], results[1], results[2]
    if has_prior:
        pmu3, psig3, qmu3, qsig3 = results[3], results[4], results[5], results[6]
    else:
        pmu3 = psig3 = None
        qmu3, qsig3 = results[3], results[4]

    def back(a, ch):
        return None if a is None else a.reshape(n, ch, h, w)

    return (out3.reshape(n, out_c, h, w),
            back(z3, latent_dim), back(kl3, latent_dim),
            (back(pmu3, latent_dim), back(psig3, latent_dim)),
            (back(qmu3, latent_dim), back(qsig3, latent_dim)))


# ----------------------------------------------------------------------------
# LatentSpaceOps: parameter construction + forward
# ----------------------------------------------------------------------------
def init_latent_space_ops(key, num_channels, latent_dims):
    """Deterministic synthetic parameters mirroring the module's __init__.

    Weights are stored directly in the kernel layout:
      encoder 1x1 conv: w (2L, C), b (2L, 1)   (PyTorch conv weight order)
      decoder 1x1 conv: w (C, L),  b (C, 1)
    """
    n_stages = len(latent_dims)
    prior_estimators = [None] * n_stages
    latent_encoders = [None] * n_stages
    latent_decoders = [None] * n_stages

    def enc_params(k, dim, latent_dim):
        k1, k2 = jax.random.split(k)
        return {"w": jax.random.normal(k1, (2 * latent_dim, dim), jnp.float32) * 0.05,
                "b": jax.random.normal(k2, (2 * latent_dim, 1), jnp.float32) * 0.01}

    def dec_params(k, dim, latent_dim):
        k1, k2 = jax.random.split(k)
        return {"w": jax.random.normal(k1, (dim, latent_dim), jnp.float32) * 0.05,
                "b": jax.random.normal(k2, (dim, 1), jnp.float32) * 0.01}

    for i in range(n_stages):
        if latent_dims[i] is None:
            continue
        dim, latent_dim = num_channels[i], latent_dims[i]
        key, ke, kd, kp = jax.random.split(key, 4)
        latent_encoders[i] = enc_params(ke, dim, latent_dim)
        latent_decoders[i] = dec_params(kd, dim, latent_dim)
        if i != n_stages - 1:
            prior_estimators[i] = enc_params(kp, dim, latent_dim)

    return {
        "latent_dims": list(latent_dims),
        "num_channels": list(num_channels),
        "prior_estimators": prior_estimators,
        "latent_encoders": latent_encoders,
        "latent_decoders": latent_decoders,
    }


def latent_space_ops_forward(params, i, encoding, previous_decoder_output, eps_key):
    """Mirrors LatentSpaceOps.forward (sampling always via the reparam trick)."""
    latent_encoder = params["latent_encoders"][i]
    latent_decoder = params["latent_decoders"][i]
    prior_estimator = params["prior_estimators"][i]
    n_stages = len(params["latent_dims"])

    if latent_encoder is None:
        return (previous_decoder_output, None, None, (None, None), (None, None))

    if i == n_stages - 1:        # last stage: standard-normal prior
        prior_estimator = None

    return _run_fused_stage(latent_encoder, latent_decoder, prior_estimator,
                            encoding, previous_decoder_output, eps_key)


# ----------------------------------------------------------------------------
if __name__ == "__main__":
    key = jax.random.PRNGKey(0)
    k_params, k_enc, k_prev, k_enc2, k_eps = jax.random.split(key, 5)

    # Small synthetic config: 3 stages, stages 0 and 2 carry latents.
    num_channels = [8, 16, 32]
    latent_dims = [4, None, 8]
    params = init_latent_space_ops(k_params, num_channels, latent_dims)

    N, H, W = 2, 16, 16

    # --- stage 0: prior estimator + concat with previous decoder output -----
    i = 0
    C = num_channels[i]
    encoding = jax.random.normal(k_enc, (N, C, H, W), jnp.float32)
    previous_decoder_output = jax.random.normal(k_prev, (N, C, H, W), jnp.float32)

    (output, latent, kl, (prior_mu, prior_sigma),
     (post_mu, post_sigma)) = latent_space_ops_forward(
        params, i, encoding, previous_decoder_output, k_eps)
    jax.block_until_ready((output, latent, kl, prior_mu, prior_sigma,
                           post_mu, post_sigma))

    assert output.shape == (N, 2 * C, H, W), output.shape
    assert latent.shape == (N, latent_dims[i], H, W), latent.shape
    assert kl.shape == (N, latent_dims[i], H, W), kl.shape
    assert prior_mu.shape == post_mu.shape == (N, latent_dims[i], H, W)
    assert prior_sigma.shape == post_sigma.shape == (N, latent_dims[i], H, W)
    # the second channel slab must be exactly the previous decoder output
    assert bool(jnp.array_equal(output[:, C:], previous_decoder_output))
    assert bool(jnp.all(jnp.isfinite(output))) and bool(jnp.all(jnp.isfinite(kl)))
    assert bool(jnp.all(post_sigma > 0)) and bool(jnp.all(prior_sigma > 0))

    # --- stage 1: no latent at this stage -> passthrough ---------------------
    passthrough = latent_space_ops_forward(
        params, 1, encoding, previous_decoder_output, k_eps)
    assert passthrough[0] is previous_decoder_output and passthrough[1] is None

    # --- stage 2 (last): standard-normal prior, no previous output -----------
    i = 2
    C2 = num_channels[i]
    encoding2 = jax.random.normal(k_enc2, (N, C2, H, W), jnp.float32)
    (output2, latent2, kl2, (pmu2, psig2), (qmu2, qsig2)) = \
        latent_space_ops_forward(params, i, encoding2, None, k_eps)
    jax.block_until_ready((output2, latent2, kl2, qmu2, qsig2))

    assert output2.shape == (N, C2, H, W), output2.shape
    assert latent2.shape == kl2.shape == (N, latent_dims[i], H, W)
    assert pmu2 is None and psig2 is None
    assert bool(jnp.all(jnp.isfinite(output2))) and bool(jnp.all(jnp.isfinite(kl2)))

    print("KERNEL_OK")
</pallas_src>

<mosaic_0001>
module attributes {stable_mosaic.version = 11 : i64} {
  func.func @_fused_stage_kernel(%arg0: i32, %arg1: i32, %arg2: memref<1x8x256xf32, #tpu.memory_space<vmem>>, %arg3: memref<1x8x256xf32, #tpu.memory_space<vmem>>, %arg4: memref<1x4x256xf32, #tpu.memory_space<vmem>>, %arg5: memref<8x8xf32, #tpu.memory_space<vmem>>, %arg6: memref<8x1xf32, #tpu.memory_space<vmem>>, %arg7: memref<8x8xf32, #tpu.memory_space<vmem>>, %arg8: memref<8x1xf32, #tpu.memory_space<vmem>>, %arg9: memref<8x4xf32, #tpu.memory_space<vmem>>, %arg10: memref<8x1xf32, #tpu.memory_space<vmem>>, %arg11: memref<1x16x256xf32, #tpu.memory_space<vmem>>, %arg12: memref<1x4x256xf32, #tpu.memory_space<vmem>>, %arg13: memref<1x4x256xf32, #tpu.memory_space<vmem>>, %arg14: memref<1x4x256xf32, #tpu.memory_space<vmem>>, %arg15: memref<1x4x256xf32, #tpu.memory_space<vmem>>, %arg16: memref<1x4x256xf32, #tpu.memory_space<vmem>>, %arg17: memref<1x4x256xf32, #tpu.memory_space<vmem>>) attributes {dimension_semantics = [#tpu.dimension_semantics<parallel>, #tpu.dimension_semantics<parallel>], iteration_bounds = array<i64: 2, 1>, scalar_prefetch = 0 : i64, scratch_operands = 0 : i64, tpu.core_type = #tpu.core_type<tc>, window_params = [{transform_indices = @transform_0, window_bounds = array<i64: 1, 8, 256>}, {transform_indices = @transform_1, window_bounds = array<i64: 1, 8, 256>}, {transform_indices = @transform_2, window_bounds = array<i64: 1, 4, 256>}, {pipeline_mode = #tpu.pipeline_mode<synchronous>, transform_indices = @transform_3, window_bounds = array<i64: 8, 8>}, {pipeline_mode = #tpu.pipeline_mode<synchronous>, transform_indices = @transform_4, window_bounds = array<i64: 8, 1>}, {pipeline_mode = #tpu.pipeline_mode<synchronous>, transform_indices = @transform_5, window_bounds = array<i64: 8, 8>}, {pipeline_mode = #tpu.pipeline_mode<synchronous>, transform_indices = @transform_6, window_bounds = array<i64: 8, 1>}, {pipeline_mode = #tpu.pipeline_mode<synchronous>, transform_indices = @transform_7, window_bounds = array<i64: 8, 4>}, {pipeline_mode = #tpu.pipeline_mode<synchronous>, transform_indices = @transform_8, window_bounds = array<i64: 8, 1>}, {transform_indices = @transform_9, window_bounds = array<i64: 1, 16, 256>}, {transform_indices = @transform_10, window_bounds = array<i64: 1, 4, 256>}, {transform_indices = @transform_11, window_bounds = array<i64: 1, 4, 256>}, {transform_indices = @transform_12, window_bounds = array<i64: 1, 4, 256>}, {transform_indices = @transform_13, window_bounds = array<i64: 1, 4, 256>}, {transform_indices = @transform_14, window_bounds = array<i64: 1, 4, 256>}, {transform_indices = @transform_15, window_bounds = array<i64: 1, 4, 256>}]} {
    %c0 = arith.constant 0 : index
    %c0_0 = arith.constant 0 : index
    %c0_1 = arith.constant 0 : index
    %0 = vector.load %arg2[%c0, %c0_0, %c0_1] : memref<1x8x256xf32, #tpu.memory_space<vmem>>, vector<1x8x256xf32>
    %1 = vector.shape_cast %0 : vector<1x8x256xf32> to vector<8x256xf32>
    %c0_2 = arith.constant 0 : index
    %c0_3 = arith.constant 0 : index
    %c0_4 = arith.constant 0 : index
    %2 = vector.load %arg3[%c0_2, %c0_3, %c0_4] : memref<1x8x256xf32, #tpu.memory_space<vmem>>, vector<1x8x256xf32>
    %3 = vector.shape_cast %2 : vector<1x8x256xf32> to vector<8x256xf32>
    %cst = arith.constant dense<0.000000e+00> : vector<256xf32>
    %4 = vector.multi_reduction <add>, %3, %cst [0] : vector<8x256xf32> to vector<256xf32>
    %5 = vector.shape_cast %4 : vector<256xf32> to vector<1x256xf32>
    %cst_5 = arith.constant 8.000000e+00 : f32
    %6 = vector.broadcast %cst_5 : f32 to vector<1x256xf32>
    %7 = arith.divf %5, %6 : vector<1x256xf32>
    %8 = vector.broadcast %7 : vector<1x256xf32> to vector<8x256xf32>
    %9 = arith.subf %3, %8 : vector<8x256xf32>
    %10 = arith.mulf %9, %9 : vector<8x256xf32>
    %cst_6 = arith.constant dense<0.000000e+00> : vector<256xf32>
    %11 = vector.multi_reduction <add>, %10, %cst_6 [0] : vector<8x256xf32> to vector<256xf32>
    %12 = vector.shape_cast %11 : vector<256xf32> to vector<1x256xf32>
    %cst_7 = arith.constant 8.000000e+00 : f32
    %13 = vector.broadcast %cst_7 : f32 to vector<1x256xf32>
    %14 = arith.divf %12, %13 : vector<1x256xf32>
    %15 = vector.broadcast %7 : vector<1x256xf32> to vector<8x256xf32>
    %16 = arith.subf %3, %15 : vector<8x256xf32>
    %cst_8 = arith.constant 9.99999974E-6 : f32
    %17 = vector.broadcast %cst_8 : f32 to vector<1x256xf32>
    %18 = arith.addf %14, %17 : vector<1x256xf32>
    %19 = math.rsqrt %18 : vector<1x256xf32>
    %20 = vector.broadcast %19 : vector<1x256xf32> to vector<8x256xf32>
    %21 = arith.mulf %16, %20 : vector<8x256xf32>
    %22 = arith.negf %21 : vector<8x256xf32>
    %23 = math.exp %22 : vector<8x256xf32>
    %cst_9 = arith.constant 1.000000e+00 : f32
    %24 = vector.broadcast %cst_9 : f32 to vector<8x256xf32>
    %25 = arith.addf %24, %23 : vector<8x256xf32>
    %26 = arith.divf %24, %25 : vector<8x256xf32>
    %27 = arith.mulf %21, %26 : vector<8x256xf32>
    %c0_10 = arith.constant 0 : index
    %c0_11 = arith.constant 0 : index
    %28 = vector.load %arg5[%c0_10, %c0_11] : memref<8x8xf32, #tpu.memory_space<vmem>>, vector<8x8xf32>
    %cst_12 = arith.constant dense<0.000000e+00> : vector<8x256xf32>
    %29 = tpu.matmul %28, %27, %cst_12 {dimension_numbers = #tpu.dot_dimension_numbers<[1], [0], [0], [1], [0, 0, 1, 1], [], []>} : vector<8x8xf32>, vector<8x256xf32>, vector<8x256xf32> -> vector<8x256xf32>
    %c0_13 = arith.constant 0 : index
    %c0_14 = arith.constant 0 : index
    %30 = vector.load %arg6[%c0_13, %c0_14] : memref<8x1xf32, #tpu.memory_space<vmem>>, vector<8x1xf32>
    %31 = vector.broadcast %30 : vector<8x1xf32> to vector<8x256xf32>
    %32 = arith.addf %29, %31 : vector<8x256xf32>
    %33 = vector.extract_strided_slice %32 {offsets = [0, 0], sizes = [4, 256], strides = [1, 1]} : vector<8x256xf32> to vector<4x256xf32>
    %34 = vector.extract_strided_slice %32 {offsets = [4, 0], sizes = [4, 256], strides = [1, 1]} : vector<8x256xf32> to vector<4x256xf32>
    %cst_15 = arith.constant 5.000000e-01 : f32
    %35 = vector.broadcast %cst_15 : f32 to vector<4x256xf32>
    %36 = arith.mulf %35, %34 : vector<4x256xf32>
    %37 = math.exp %36 : vector<4x256xf32>
    %c0_16 = arith.constant 0 : index
    %c0_17 = arith.constant 0 : index
    %c0_18 = arith.constant 0 : index
    %38 = vector.load %arg14[%c0_16, %c0_17, %c0_18] : memref<1x4x256xf32, #tpu.memory_space<vmem>>, vector<1x4x256xf32>
    %39 = vector.shape_cast %38 : vector<1x4x256xf32> to vector<4x256xf32>
    %40 = vector.shape_cast %33 : vector<4x256xf32> to vector<1x4x256xf32>
    tpu.vector_store %arg14[%c0_16, %c0_17, %c0_18], %40 {strides = array<i32>} : memref<1x4x256xf32, #tpu.memory_space<vmem>>, vector<1x4x256xf32>,
    %c0_19 = arith.constant 0 : index
    %c0_20 = arith.constant 0 : index
    %c0_21 = arith.constant 0 : index
    %41 = vector.load %arg15[%c0_19, %c0_20, %c0_21] : memref<1x4x256xf32, #tpu.memory_space<vmem>>, vector<1x4x256xf32>
    %42 = vector.shape_cast %41 : vector<1x4x256xf32> to vector<4x256xf32>
    %43 = vector.shape_cast %37 : vector<4x256xf32> to vector<1x4x256xf32>
    tpu.vector_store %arg15[%c0_19, %c0_20, %c0_21], %43 {strides = array<i32>} : memref<1x4x256xf32, #tpu.memory_space<vmem>>, vector<1x4x256xf32>,
    %cst_22 = arith.constant dense<0.000000e+00> : vector<256xf32>
    %44 = vector.multi_reduction <add>, %1, %cst_22 [0] : vector<8x256xf32> to vector<256xf32>
    %45 = vector.shape_cast %44 : vector<256xf32> to vector<1x256xf32>
    %cst_23 = arith.constant 8.000000e+00 : f32
    %46 = vector.broadcast %cst_23 : f32 to vector<1x256xf32>
    %47 = arith.divf %45, %46 : vector<1x256xf32>
    %48 = vector.broadcast %47 : vector<1x256xf32> to vector<8x256xf32>
    %49 = arith.subf %1, %48 : vector<8x256xf32>
    %50 = arith.mulf %49, %49 : vector<8x256xf32>
    %cst_24 = arith.constant dense<0.000000e+00> : vector<256xf32>
    %51 = vector.multi_reduction <add>, %50, %cst_24 [0] : vector<8x256xf32> to vector<256xf32>
    %52 = vector.shape_cast %51 : vector<256xf32> to vector<1x256xf32>
    %cst_25 = arith.constant 8.000000e+00 : f32
    %53 = vector.broadcast %cst_25 : f32 to vector<1x256xf32>
    %54 = arith.divf %52, %53 : vector<1x256xf32>
    %55 = vector.broadcast %47 : vector<1x256xf32> to vector<8x256xf32>
    %56 = arith.subf %1, %55 : vector<8x256xf32>
    %cst_26 = arith.constant 9.99999974E-6 : f32
    %57 = vector.broadcast %cst_26 : f32 to vector<1x256xf32>
    %58 = arith.addf %54, %57 : vector<1x256xf32>
    %59 = math.rsqrt %58 : vector<1x256xf32>
    %60 = vector.broadcast %59 : vector<1x256xf32> to vector<8x256xf32>
    %61 = arith.mulf %56, %60 : vector<8x256xf32>
    %62 = arith.negf %61 : vector<8x256xf32>
    %63 = math.exp %62 : vector<8x256xf32>
    %cst_27 = arith.constant 1.000000e+00 : f32
    %64 = vector.broadcast %cst_27 : f32 to vector<8x256xf32>
    %65 = arith.addf %64, %63 : vector<8x256xf32>
    %66 = arith.divf %64, %65 : vector<8x256xf32>
    %67 = arith.mulf %61, %66 : vector<8x256xf32>
    %c0_28 = arith.constant 0 : index
    %c0_29 = arith.constant 0 : index
    %68 = vector.load %arg7[%c0_28, %c0_29] : memref<8x8xf32, #tpu.memory_space<vmem>>, vector<8x8xf32>
    %cst_30 = arith.constant dense<0.000000e+00> : vector<8x256xf32>
    %69 = tpu.matmul %68, %67, %cst_30 {dimension_numbers = #tpu.dot_dimension_numbers<[1], [0], [0], [1], [0, 0, 1, 1], [], []>} : vector<8x8xf32>, vector<8x256xf32>, vector<8x256xf32> -> vector<8x256xf32>
    %c0_31 = arith.constant 0 : index
    %c0_32 = arith.constant 0 : index
    %70 = vector.load %arg8[%c0_31, %c0_32] : memref<8x1xf32, #tpu.memory_space<vmem>>, vector<8x1xf32>
    %71 = vector.broadcast %70 : vector<8x1xf32> to vector<8x256xf32>
    %72 = arith.addf %69, %71 : vector<8x256xf32>
    %73 = vector.extract_strided_slice %72 {offsets = [0, 0], sizes = [4, 256], strides = [1, 1]} : vector<8x256xf32> to vector<4x256xf32>
    %74 = vector.extract_strided_slice %72 {offsets = [4, 0], sizes = [4, 256], strides = [1, 1]} : vector<8x256xf32> to vector<4x256xf32>
    %75 = arith.addf %73, %33 : vector<4x256xf32>
    %76 = arith.addf %74, %34 : vector<4x256xf32>
    %cst_33 = arith.constant 5.000000e-01 : f32
    %77 = vector.broadcast %cst_33 : f32 to vector<4x256xf32>
    %78 = arith.mulf %77, %76 : vector<4x256xf32>
    %79 = math.exp %78 : vector<4x256xf32>
    %c0_34 = arith.constant 0 : index
    %c0_35 = arith.constant 0 : index
    %c0_36 = arith.constant 0 : index
    %80 = vector.load %arg16[%c0_34, %c0_35, %c0_36] : memref<1x4x256xf32, #tpu.memory_space<vmem>>, vector<1x4x256xf32>
    %81 = vector.shape_cast %80 : vector<1x4x256xf32> to vector<4x256xf32>
    %82 = vector.shape_cast %75 : vector<4x256xf32> to vector<1x4x256xf32>
    tpu.vector_store %arg16[%c0_34, %c0_35, %c0_36], %82 {strides = array<i32>} : memref<1x4x256xf32, #tpu.memory_space<vmem>>, vector<1x4x256xf32>,
    %c0_37 = arith.constant 0 : index
    %c0_38 = arith.constant 0 : index
    %c0_39 = arith.constant 0 : index
    %83 = vector.load %arg17[%c0_37, %c0_38, %c0_39] : memref<1x4x256xf32, #tpu.memory_space<vmem>>, vector<1x4x256xf32>
    %84 = vector.shape_cast %83 : vector<1x4x256xf32> to vector<4x256xf32>
    %85 = vector.shape_cast %79 : vector<4x256xf32> to vector<1x4x256xf32>
    tpu.vector_store %arg17[%c0_37, %c0_38, %c0_39], %85 {strides = array<i32>} : memref<1x4x256xf32, #tpu.memory_space<vmem>>, vector<1x4x256xf32>,
    %c0_40 = arith.constant 0 : index
    %c0_41 = arith.constant 0 : index
    %c0_42 = arith.constant 0 : index
    %86 = vector.load %arg4[%c0_40, %c0_41, %c0_42] : memref<1x4x256xf32, #tpu.memory_space<vmem>>, vector<1x4x256xf32>
    %87 = vector.shape_cast %86 : vector<1x4x256xf32> to vector<4x256xf32>
    %88 = arith.mulf %79, %87 : vector<4x256xf32>
    %89 = arith.addf %75, %88 : vector<4x256xf32>
    %c0_43 = arith.constant 0 : index
    %c0_44 = arith.constant 0 : index
    %c0_45 = arith.constant 0 : index
    %90 = vector.load %arg12[%c0_43, %c0_44, %c0_45] : memref<1x4x256xf32, #tpu.memory_space<vmem>>, vector<1x4x256xf32>
    %91 = vector.shape_cast %90 : vector<1x4x256xf32> to vector<4x256xf32>
    %92 = vector.shape_cast %89 : vector<4x256xf32> to vector<1x4x256xf32>
    tpu.vector_store %arg12[%c0_43, %c0_44, %c0_45], %92 {strides = array<i32>} : memref<1x4x256xf32, #tpu.memory_space<vmem>>, vector<1x4x256xf32>,
    %93 = arith.subf %34, %76 : vector<4x256xf32>
    %cst_46 = arith.constant 5.000000e-01 : f32
    %94 = vector.broadcast %cst_46 : f32 to vector<4x256xf32>
    %95 = arith.mulf %94, %93 : vector<4x256xf32>
    %96 = arith.mulf %79, %79 : vector<4x256xf32>
    %97 = arith.subf %75, %33 : vector<4x256xf32>
    %98 = arith.mulf %97, %97 : vector<4x256xf32>
    %99 = arith.addf %96, %98 : vector<4x256xf32>
    %cst_47 = arith.constant 0.000000e+00 : f32
    %100 = vector.broadcast %cst_47 : f32 to vector<4x256xf32>
    %101 = arith.subf %100, %34 : vector<4x256xf32>
    %102 = math.exp %101 : vector<4x256xf32>
    %cst_48 = arith.constant 5.000000e-01 : f32
    %103 = vector.broadcast %cst_48 : f32 to vector<4x256xf32>
    %104 = arith.mulf %103, %102 : vector<4x256xf32>
    %105 = arith.mulf %99, %104 : vector<4x256xf32>
    %106 = arith.addf %95, %105 : vector<4x256xf32>
    %cst_49 = arith.constant 5.000000e-01 : f32
    %107 = vector.broadcast %cst_49 : f32 to vector<4x256xf32>
    %108 = arith.subf %106, %107 : vector<4x256xf32>
    %c0_50 = arith.constant 0 : index
    %c0_51 = arith.constant 0 : index
    %c0_52 = arith.constant 0 : index
    %109 = vector.load %arg13[%c0_50, %c0_51, %c0_52] : memref<1x4x256xf32, #tpu.memory_space<vmem>>, vector<1x4x256xf32>
    %110 = vector.shape_cast %109 : vector<1x4x256xf32> to vector<4x256xf32>
    %111 = vector.shape_cast %108 : vector<4x256xf32> to vector<1x4x256xf32>
    tpu.vector_store %arg13[%c0_50, %c0_51, %c0_52], %111 {strides = array<i32>} : memref<1x4x256xf32, #tpu.memory_space<vmem>>, vector<1x4x256xf32>,
    %112 = arith.negf %89 : vector<4x256xf32>
    %113 = math.exp %112 : vector<4x256xf32>
    %cst_53 = arith.constant 1.000000e+00 : f32
    %114 = vector.broadcast %cst_53 : f32 to vector<4x256xf32>
    %115 = arith.addf %114, %113 : vector<4x256xf32>
    %116 = arith.divf %114, %115 : vector<4x256xf32>
    %117 = arith.mulf %89, %116 : vector<4x256xf32>
    %c0_54 = arith.constant 0 : index
    %c0_55 = arith.constant 0 : index
    %118 = vector.load %arg9[%c0_54, %c0_55] : memref<8x4xf32, #tpu.memory_space<vmem>>, vector<8x4xf32>
    %cst_56 = arith.constant dense<0.000000e+00> : vector<8x256xf32>
    %119 = tpu.matmul %118, %117, %cst_56 {dimension_numbers = #tpu.dot_dimension_numbers<[1], [0], [0], [1], [0, 0, 1, 1], [], []>} : vector<8x4xf32>, vector<4x256xf32>, vector<8x256xf32> -> vector<8x256xf32>
    %c0_57 = arith.constant 0 : index
    %c0_58 = arith.constant 0 : index
    %120 = vector.load %arg10[%c0_57, %c0_58] : memref<8x1xf32, #tpu.memory_space<vmem>>, vector<8x1xf32>
    %121 = vector.broadcast %120 : vector<8x1xf32> to vector<8x256xf32>
    %122 = arith.addf %119, %121 : vector<8x256xf32>
    %c0_59 = arith.constant 0 : index
    %c0_60 = arith.constant 0 : index
    %c0_61 = arith.constant 0 : index
    %123 = vector.load %arg11[%c0_59, %c0_60, %c0_61] : memref<1x16x256xf32, #tpu.memory_space<vmem>>, vector<1x8x256xf32>
    %124 = vector.shape_cast %123 : vector<1x8x256xf32> to vector<8x256xf32>
    %125 = vector.shape_cast %122 : vector<8x256xf32> to vector<1x8x256xf32>
    tpu.vector_store %arg11[%c0_59, %c0_60, %c0_61], %125 {strides = array<i32>} : memref<1x16x256xf32, #tpu.memory_space<vmem>>, vector<1x8x256xf32>,
    %c0_62 = arith.constant 0 : index
    %c8 = arith.constant 8 : index
    %c0_63 = arith.constant 0 : index
    %126 = vector.load %arg11[%c0_62, %c8, %c0_63] : memref<1x16x256xf32, #tpu.memory_space<vmem>>, vector<1x8x256xf32>
    %127 = vector.shape_cast %126 : vector<1x8x256xf32> to vector<8x256xf32>
    %128 = vector.shape_cast %3 : vector<8x256xf32> to vector<1x8x256xf32>
    tpu.vector_store %arg11[%c0_62, %c8, %c0_63], %128 {strides = array<i32>} : memref<1x16x256xf32, #tpu.memory_space<vmem>>, vector<1x8x256xf32>,
    return
  }
  func.func @transform_0(%arg0: i32, %arg1: i32) -> (i32, i32, i32) {
    %c0_i32 = arith.constant 0 : i32
    %c0_i32_0 = arith.constant 0 : i32
    return %arg0, %c0_i32, %arg1 : i32, i32, i32
  }
  func.func @transform_1(%arg0: i32, %arg1: i32) -> (i32, i32, i32) {
    %c0_i32 = arith.constant 0 : i32
    %c0_i32_0 = arith.constant 0 : i32
    return %arg0, %c0_i32, %arg1 : i32, i32, i32
  }
  func.func @transform_2(%arg0: i32, %arg1: i32) -> (i32, i32, i32) {
    %c0_i32 = arith.constant 0 : i32
    %c0_i32_0 = arith.constant 0 : i32
    return %arg0, %c0_i32, %arg1 : i32, i32, i32
  }
  func.func @transform_3(%arg0: i32, %arg1: i32) -> (i32, i32) {
    %c0_i32 = arith.constant 0 : i32
    %c0_i32_0 = arith.constant 0 : i32
    %c0_i32_1 = arith.constant 0 : i32
    return %c0_i32, %c0_i32_0 : i32, i32
  }
  func.func @transform_4(%arg0: i32, %arg1: i32) -> (i32, i32) {
    %c0_i32 = arith.constant 0 : i32
    %c0_i32_0 = arith.constant 0 : i32
    %c0_i32_1 = arith.constant 0 : i32
    return %c0_i32, %c0_i32_0 : i32, i32
  }
  func.func @transform_5(%arg0: i32, %arg1: i32) -> (i32, i32) {
    %c0_i32 = arith.constant 0 : i32
    %c0_i32_0 = arith.constant 0 : i32
    %c0_i32_1 = arith.constant 0 : i32
    return %c0_i32, %c0_i32_0 : i32, i32
  }
  func.func @transform_6(%arg0: i32, %arg1: i32) -> (i32, i32) {
    %c0_i32 = arith.constant 0 : i32
    %c0_i32_0 = arith.constant 0 : i32
    %c0_i32_1 = arith.constant 0 : i32
    return %c0_i32, %c0_i32_0 : i32, i32
  }
  func.func @transform_7(%arg0: i32, %arg1: i32) -> (i32, i32) {
    %c0_i32 = arith.constant 0 : i32
    %c0_i32_0 = arith.constant 0 : i32
    %c0_i32_1 = arith.constant 0 : i32
    return %c0_i32, %c0_i32_0 : i32, i32
  }
  func.func @transform_8(%arg0: i32, %arg1: i32) -> (i32, i32) {
    %c0_i32 = arith.constant 0 : i32
    %c0_i32_0 = arith.constant 0 : i32
    %c0_i32_1 = arith.constant 0 : i32
    return %c0_i32, %c0_i32_0 : i32, i32
  }
  func.func @transform_9(%arg0: i32, %arg1: i32) -> (i32, i32, i32) {
    %c0_i32 = arith.constant 0 : i32
    %c0_i32_0 = arith.constant 0 : i32
    return %arg0, %c0_i32, %arg1 : i32, i32, i32
  }
  func.func @transform_10(%arg0: i32, %arg1: i32) -> (i32, i32, i32) {
    %c0_i32 = arith.constant 0 : i32
    %c0_i32_0 = arith.constant 0 : i32
    return %arg0, %c0_i32, %arg1 : i32, i32, i32
  }
  func.func @transform_11(%arg0: i32, %arg1: i32) -> (i32, i32, i32) {
    %c0_i32 = arith.constant 0 : i32
    %c0_i32_0 = arith.constant 0 : i32
    return %arg0, %c0_i32, %arg1 : i32, i32, i32
  }
  func.func @transform_12(%arg0: i32, %arg1: i32) -> (i32, i32, i32) {
    %c0_i32 = arith.constant 0 : i32
    %c0_i32_0 = arith.constant 0 : i32
    return %arg0, %c0_i32, %arg1 : i32, i32, i32
  }
  func.func @transform_13(%arg0: i32, %arg1: i32) -> (i32, i32, i32) {
    %c0_i32 = arith.constant 0 : i32
    %c0_i32_0 = arith.constant 0 : i32
    return %arg0, %c0_i32, %arg1 : i32, i32, i32
  }
  func.func @transform_14(%arg0: i32, %arg1: i32) -> (i32, i32, i32) {
    %c0_i32 = arith.constant 0 : i32
    %c0_i32_0 = arith.constant 0 : i32
    return %arg0, %c0_i32, %arg1 : i32, i32, i32
  }
  func.func @transform_15(%arg0: i32, %arg1: i32) -> (i32, i32, i32) {
    %c0_i32 = arith.constant 0 : i32
    %c0_i32_0 = arith.constant 0 : i32
    return %arg0, %c0_i32, %arg1 : i32, i32, i32
  }
}

</mosaic_0001>

<llo_original>
// kernel: tpu_custom_call.1
$region0: #{tpu_custom_call.1}
  #allocation0 [shape = 'u32[]', space=smem, size = 0x4, offset = 0x4, fixed_abs, tag = 'smem constant byte address 0x4 - core index']
  #allocation1 [shape = 'u32[72,128]{1,0:T(1,128)}', space=vmem, size = 0x9000, scoped, tag = 'internal scratch']
  %s0 = inlined_call_operand.vmem [shape: f32[2,8,256], index: 0, kind: input, shape index: {}]
  %s1 = inlined_call_operand.hbm [shape: f32[2,8,256], index: 1, kind: input, shape index: {}]
  %s2 = inlined_call_operand.hbm [shape: f32[2,4,256], index: 2, kind: input, shape index: {}]
  %s3 = inlined_call_operand.vmem [shape: f32[8,8], index: 3, kind: input, shape index: {}]
  %s4 = inlined_call_operand.vmem [shape: f32[8,1], index: 4, kind: input, shape index: {}]
  %s5 = inlined_call_operand.hbm [shape: f32[8,8], index: 5, kind: input, shape index: {}]
  %s6 = inlined_call_operand.vmem [shape: f32[8,1], index: 6, kind: input, shape index: {}]
  %s7 = inlined_call_operand.vmem [shape: f32[8,4], index: 7, kind: input, shape index: {}]
  %s8 = inlined_call_operand.vmem [shape: f32[8,1], index: 8, kind: input, shape index: {}]
  %s9 = inlined_call_operand.hbm [shape: f32[2,16,256], index: 9, kind: output, shape index: {0}]
  %s10 = inlined_call_operand.hbm [shape: f32[2,4,256], index: 10, kind: output, shape index: {1}]
  %s11 = inlined_call_operand.hbm [shape: f32[2,4,256], index: 11, kind: output, shape index: {2}]
  %s12 = inlined_call_operand.hbm [shape: f32[2,4,256], index: 12, kind: output, shape index: {3}]
  %s13 = inlined_call_operand.hbm [shape: f32[2,4,256], index: 13, kind: output, shape index: {4}]
  %s14 = inlined_call_operand.hbm [shape: f32[2,4,256], index: 14, kind: output, shape index: {5}]
  %s15 = inlined_call_operand.hbm [shape: f32[2,4,256], index: 15, kind: output, shape index: {6}]
  %16 = xla_tuple %s9, %s10, %s11, %s12, %s13, %s14, %s15
  %s17 = sld [smem:[#allocation0]]
  $region129: #{tpu_custom_call.1} parent=0
    _
  %s19 = ssub.s32 1, %s17
  %s20 = scalar_select 0, %s19, %s17
  $region1: #{tpu_custom_call.1} parent=0
    #allocation2 [shape = 'u8[16384]{0}', space=vmem, size = 0x4000, scoped, tag = 'input window, operand 1']
    #allocation3 [shape = 's32[2]{0}', space=sflag, size = 0x8, scoped, tag = 'scoped memory for tpu_custom_call.1']
    #allocation4 [shape = 's32[2]{0}', space=sflag, size = 0x8, scoped, tag = 'scoped memory for tpu_custom_call.1']
    #allocation5 [shape = 'u8[8192]{0}', space=vmem, size = 0x2000, scoped, tag = 'input window, operand 2']
    #allocation6 [shape = 's32[2]{0}', space=sflag, size = 0x8, scoped, tag = 'scoped memory for tpu_custom_call.1']
    #allocation7 [shape = 'u8[4096]{0}', space=vmem, size = 0x1000, scoped, tag = 'input window, operand 5, single buffered']
    #allocation8 [shape = 'u8[32768]{0}', space=vmem, size = 0x8000, scoped, tag = 'output window, operand 0']
    #allocation9 [shape = 'u8[8192]{0}', space=vmem, size = 0x2000, scoped, tag = 'output window, operand 1']
    #allocation10 [shape = 's32[2]{0}', space=sflag, size = 0x8, scoped, tag = 'scoped memory for tpu_custom_call.1']
    #allocation11 [shape = 'u8[8192]{0}', space=vmem, size = 0x2000, scoped, tag = 'output window, operand 2']
    #allocation12 [shape = 'u8[8192]{0}', space=vmem, size = 0x2000, scoped, tag = 'output window, operand 3']
    #allocation13 [shape = 's32[2]{0}', space=sflag, size = 0x8, scoped, tag = 'scoped memory for tpu_custom_call.1']
    #allocation14 [shape = 'u8[8192]{0}', space=vmem, size = 0x2000, scoped, tag = 'output window, operand 4']
    #allocation15 [shape = 'u8[8192]{0}', space=vmem, size = 0x2000, scoped, tag = 'output window, operand 5']
    #allocation16 [shape = 's32[2]{0}', space=sflag, size = 0x8, scoped, tag = 'scoped memory for tpu_custom_call.1']
    #allocation17 [shape = 'u8[8192]{0}', space=vmem, size = 0x2000, scoped, tag = 'output window, operand 6']
    %21 = vsyncpa [#allocation3], 0
    %s22 = scalar_lea.sflag [#allocation3], 1
    %23 = vsyncpa %s22, 0
    %24 = vsyncpa [#allocation6], 0
    %s25 = scalar_lea.sflag [#allocation6], 1
    %26 = vsyncpa %s25, 0
    %27 = vsyncpa [#allocation4], 0
    %s28 = scalar_lea.sflag [#allocation4], 1
    %29 = vsyncpa %s28, 0
    %30 = vsyncpa [#allocation10], 0
    %s31 = scalar_lea.sflag [#allocation10], 1
    %32 = vsyncpa %s31, 0
    %33 = vsyncpa [#allocation13], 0
    %s34 = scalar_lea.sflag [#allocation13], 1
    %35 = vsyncpa %s34, 0
    %36 = vsyncpa [#allocation16], 0
    %s37 = scalar_lea.sflag [#allocation16], 1
    %38 = vsyncpa %s37, 0
    loop: start=0, step=1, limit=4
    $region2: #{tpu_custom_call.1} parent=1 // loop_pre_header
      _
    $region3: #{tpu_custom_call.1} parent=1 // loop_header
      %s40 = sphi 0, %s44
      %p41 = scmp.ge.s32.totalorder %s40, 4
      %s47 = sphi 0, %s59
      %s48 = sphi 0, %s55
      %s49 = sphi 0, %s47
      %s50 = sphi 0, %s48
      %s51 = sphi 0, %s49
      %s52 = sphi 0, %s50
      %s64 = sphi 0, %s66
      %s67 = sphi 0, %s64
      %s68 = sphi 0, %s67
      %s84 = sphi 0, %s68
      %s92 = sphi 0, %s94
      %s95 = sphi 0, %s92
      %s96 = sphi 0, %s95
      %s112 = sphi 0, %s96
      %s120 = sphi 0, %s122
      %s123 = sphi 0, %s120
      %s124 = sphi 0, %s123
      %s140 = sphi 0, %s124
      %s144 = sphi 0, %s144
      %s146 = sphi 0, %s144
      %s147 = sphi 0, %s146
      %s161 = sphi 0, %s147
      %s165 = sphi 0, %s165
      %s167 = sphi 0, %s165
      %s168 = sphi 0, %s167
      %s182 = sphi 0, %s168
      %s186 = sphi 0, %s186
      %s188 = sphi 0, %s186
      %s189 = sphi 0, %s188
      %s203 = sphi 0, %s189
      %s207 = sphi 0, %s207
      %s209 = sphi 0, %s207
      %s210 = sphi 0, %s209
      %s224 = sphi 0, %s210
      %s228 = sphi 0, %s228
      %s230 = sphi 0, %s228
      %s231 = sphi 0, %s230
      %s245 = sphi 0, %s231
      %s249 = sphi 0, %s249
      %s251 = sphi 0, %s249
      %s252 = sphi 0, %s251
      %s266 = sphi 0, %s252
      %s274 = sphi 0, %s276
      %s277 = sphi 0, %s274
      %s278 = sphi 0, %s277
      %s294 = sphi 0, %s278
      %s302 = sphi 0, %s304
      %s305 = sphi 0, %s302
      %s306 = sphi 0, %s305
      %s322 = sphi 0, %s306
      %s330 = sphi 0, %s332
      %s333 = sphi 0, %s330
      %s334 = sphi 0, %s333
      %s350 = sphi 0, %s334
      %s358 = sphi 0, %s360
      %s361 = sphi 0, %s358
      %s362 = sphi 0, %s361
      %s378 = sphi 0, %s362
      %s386 = sphi 0, %s388
      %s389 = sphi 0, %s386
      %s390 = sphi 0, %s389
      %s406 = sphi 0, %s390
      %s414 = sphi 0, %s416
      %s417 = sphi 0, %s414
      %s418 = sphi 0, %s417
      %s434 = sphi 0, %s418
      %s442 = sphi 0, %s444
      %s445 = sphi 0, %s442
      %s446 = sphi 0, %s445
      %s462 = sphi 0, %s446
    $region4: #{tpu_custom_call.1} parent=1 // loop_header_branch
      %43 = sbr.rel (%p41) target = $region8
    $region5: #{tpu_custom_call.1} parent=1 // loop_body
      %s45 = ssub.s32 %s40, 1
      %s46 = ssub.s32 %s40, 2
      %s53 = sadd.s32 1, %s48
      %p54 = scmp.ge.s32.totalorder %s53, 1
      %s55 = scalar_select %p54, 0, %s53
      %s56 = sadd.s32 1, %s47
      %s57 = scalar_select %p54, %s56, %s47
      %p58 = scmp.ge.s32.totalorder %s57, 2
      %s59 = scalar_select %p58, 0, %s57
      %s60 = ssub.s32 %s47, %s59
      %s61 = ssub.s32 %s48, %s55
      %s62 = sor.u32 %s60, %s61
      %p63 = scmp.eq.s32.totalorder %s62, 0
      %s65 = sadd.s32 %s64, 1
      %s66 = scalar_select %p63, %s64, %s65
      %p69 = pneg %p63
      %p70 = scmp.eq.s32.totalorder %s40, 1
      %p71 = por %p69, %p70
      %p72 = scmp.ne.s32.totalorder %s64, %s67
      %p73 = scmp.eq.s32.totalorder %s40, 0
      %p74 = por %p72, %p73
      %p75 = scmp.ne.s32.totalorder %s64, %s67
      %p76 = scmp.eq.s32.totalorder %s45, 1
      %p77 = por %p75, %p76
      %p78 = scmp.ne.s32.totalorder %s67, %s68
      %p79 = scmp.eq.s32.totalorder %s45, 0
      %p80 = por %p78, %p79
      %p81 = scmp.ne.s32.totalorder %s67, %s68
      %p82 = scmp.eq.s32.totalorder %s46, 1
      %p83 = por %p81, %p82
      %p85 = scmp.ne.s32.totalorder %s68, %s84
      %p86 = scmp.eq.s32.totalorder %s46, 0
      %p87 = por %p85, %p86
      %s88 = ssub.s32 %s47, %s59
      %s89 = ssub.s32 %s48, %s55
      %s90 = sor.u32 %s88, %s89
      %p91 = scmp.eq.s32.totalorder %s90, 0
      %s93 = sadd.s32 %s92, 1
      %s94 = scalar_select %p91, %s92, %s93
      %p97 = pneg %p91
      %p98 = scmp.eq.s32.totalorder %s40, 1
      %p99 = por %p97, %p98
      %p100 = scmp.ne.s32.totalorder %s92, %s95
      %p101 = scmp.eq.s32.totalorder %s40, 0
      %p102 = por %p100, %p101
      %p103 = scmp.ne.s32.totalorder %s92, %s95
      %p104 = scmp.eq.s32.totalorder %s45, 1
      %p105 = por %p103, %p104
      %p106 = scmp.ne.s32.totalorder %s95, %s96
      %p107 = scmp.eq.s32.totalorder %s45, 0
      %p108 = por %p106, %p107
      %p109 = scmp.ne.s32.totalorder %s95, %s96
      %p110 = scmp.eq.s32.totalorder %s46, 1
      %p111 = por %p109, %p110
      %p113 = scmp.ne.s32.totalorder %s96, %s112
      %p114 = scmp.eq.s32.totalorder %s46, 0
      %p115 = por %p113, %p114
      %s116 = ssub.s32 %s47, %s59
      %s117 = ssub.s32 %s48, %s55
      %s118 = sor.u32 %s116, %s117
      %p119 = scmp.eq.s32.totalorder %s118, 0
      %s121 = sadd.s32 %s120, 1
      %s122 = scalar_select %p119, %s120, %s121
      %p125 = pneg %p119
      %p126 = scmp.eq.s32.totalorder %s40, 1
      %p127 = por %p125, %p126
      %p128 = scmp.ne.s32.totalorder %s120, %s123
      %p129 = scmp.eq.s32.totalorder %s40, 0
      %p130 = por %p128, %p129
      %p131 = scmp.ne.s32.totalorder %s120, %s123
      %p132 = scmp.eq.s32.totalorder %s45, 1
      %p133 = por %p131, %p132
      %p134 = scmp.ne.s32.totalorder %s123, %s124
      %p135 = scmp.eq.s32.totalorder %s45, 0
      %p136 = por %p134, %p135
      %p137 = scmp.ne.s32.totalorder %s123, %s124
      %p138 = scmp.eq.s32.totalorder %s46, 1
      %p139 = por %p137, %p138
      %p141 = scmp.ne.s32.totalorder %s124, %s140
      %p142 = scmp.eq.s32.totalorder %s46, 0
      %p143 = por %p141, %p142
      %s145 = sadd.s32 %s144, 1
      %p148 = scmp.eq.s32.totalorder %s40, 1
      %p149 = scmp.ne.s32.totalorder %s144, %s146
      %p150 = scmp.eq.s32.totalorder %s40, 0
      %p151 = por %p149, %p150
      %p152 = scmp.ne.s32.totalorder %s144, %s146
      %p153 = scmp.eq.s32.totalorder %s45, 1
      %p154 = por %p152, %p153
      %p155 = scmp.ne.s32.totalorder %s146, %s147
      %p156 = scmp.eq.s32.totalorder %s45, 0
      %p157 = por %p155, %p156
      %p158 = scmp.ne.s32.totalorder %s146, %s147
      %p159 = scmp.eq.s32.totalorder %s46, 1
      %p160 = por %p158, %p159
      %p162 = scmp.ne.s32.totalorder %s147, %s161
      %p163 = scmp.eq.s32.totalorder %s46, 0
      %p164 = por %p162, %p163
      %s166 = sadd.s32 %s165, 1
      %p169 = scmp.eq.s32.totalorder %s40, 1
      %p170 = scmp.ne.s32.totalorder %s165, %s167
      %p171 = scmp.eq.s32.totalorder %s40, 0
      %p172 = por %p170, %p171
      %p173 = scmp.ne.s32.totalorder %s165, %s167
      %p174 = scmp.eq.s32.totalorder %s45, 1
      %p175 = por %p173, %p174
      %p176 = scmp.ne.s32.totalorder %s167, %s168
      %p177 = scmp.eq.s32.totalorder %s45, 0
      %p178 = por %p176, %p177
      %p179 = scmp.ne.s32.totalorder %s167, %s168
      %p180 = scmp.eq.s32.totalorder %s46, 1
      %p181 = por %p179, %p180
      %p183 = scmp.ne.s32.totalorder %s168, %s182
      %p184 = scmp.eq.s32.totalorder %s46, 0
      %p185 = por %p183, %p184
      %s187 = sadd.s32 %s186, 1
      %p190 = scmp.eq.s32.totalorder %s40, 1
      %p191 = scmp.ne.s32.totalorder %s186, %s188
      %p192 = scmp.eq.s32.totalorder %s40, 0
      %p193 = por %p191, %p192
      %p194 = scmp.ne.s32.totalorder %s186, %s188
      %p195 = scmp.eq.s32.totalorder %s45, 1
      %p196 = por %p194, %p195
      %p197 = scmp.ne.s32.totalorder %s188, %s189
      %p198 = scmp.eq.s32.totalorder %s45, 0
      %p199 = por %p197, %p198
      %p200 = scmp.ne.s32.totalorder %s188, %s189
      %p201 = scmp.eq.s32.totalorder %s46, 1
      %p202 = por %p200, %p201
      %p204 = scmp.ne.s32.totalorder %s189, %s203
      %p205 = scmp.eq.s32.totalorder %s46, 0
      %p206 = por %p204, %p205
      %s208 = sadd.s32 %s207, 1
      %p211 = scmp.eq.s32.totalorder %s40, 1
      %p212 = scmp.ne.s32.totalorder %s207, %s209
      %p213 = scmp.eq.s32.totalorder %s40, 0
      %p214 = por %p212, %p213
      %p215 = scmp.ne.s32.totalorder %s207, %s209
      %p216 = scmp.eq.s32.totalorder %s45, 1
      %p217 = por %p215, %p216
      %p218 = scmp.ne.s32.totalorder %s209, %s210
      %p219 = scmp.eq.s32.totalorder %s45, 0
      %p220 = por %p218, %p219
      %p221 = scmp.ne.s32.totalorder %s209, %s210
      %p222 = scmp.eq.s32.totalorder %s46, 1
      %p223 = por %p221, %p222
      %p225 = scmp.ne.s32.totalorder %s210, %s224
      %p226 = scmp.eq.s32.totalorder %s46, 0
      %p227 = por %p225, %p226
      %s229 = sadd.s32 %s228, 1
      %p232 = scmp.eq.s32.totalorder %s40, 1
      %p233 = scmp.ne.s32.totalorder %s228, %s230
      %p234 = scmp.eq.s32.totalorder %s40, 0
      %p235 = por %p233, %p234
      %p236 = scmp.ne.s32.totalorder %s228, %s230
      %p237 = scmp.eq.s32.totalorder %s45, 1
      %p238 = por %p236, %p237
      %p239 = scmp.ne.s32.totalorder %s230, %s231
      %p240 = scmp.eq.s32.totalorder %s45, 0
      %p241 = por %p239, %p240
      %p242 = scmp.ne.s32.totalorder %s230, %s231
      %p243 = scmp.eq.s32.totalorder %s46, 1
      %p244 = por %p242, %p243
      %p246 = scmp.ne.s32.totalorder %s231, %s245
      %p247 = scmp.eq.s32.totalorder %s46, 0
      %p248 = por %p246, %p247
      %s250 = sadd.s32 %s249, 1
      %p253 = scmp.eq.s32.totalorder %s40, 1
      %p254 = scmp.ne.s32.totalorder %s249, %s251
      %p255 = scmp.eq.s32.totalorder %s40, 0
      %p256 = por %p254, %p255
      %p257 = scmp.ne.s32.totalorder %s249, %s251
      %p258 = scmp.eq.s32.totalorder %s45, 1
      %p259 = por %p257, %p258
      %p260 = scmp.ne.s32.totalorder %s251, %s252
      %p261 = scmp.eq.s32.totalorder %s45, 0
      %p262 = por %p260, %p261
      %p263 = scmp.ne.s32.totalorder %s251, %s252
      %p264 = scmp.eq.s32.totalorder %s46, 1
      %p265 = por %p263, %p264
      %p267 = scmp.ne.s32.totalorder %s252, %s266
      %p268 = scmp.eq.s32.totalorder %s46, 0
      %p269 = por %p267, %p268
      %s270 = ssub.s32 %s47, %s59
      %s271 = ssub.s32 %s48, %s55
      %s272 = sor.u32 %s270, %s271
      %p273 = scmp.eq.s32.totalorder %s272, 0
      %s275 = sadd.s32 %s274, 1
      %s276 = scalar_select %p273, %s274, %s275
      %p279 = pneg %p273
      %p280 = scmp.eq.s32.totalorder %s40, 1
      %p281 = por %p279, %p280
      %p282 = scmp.ne.s32.totalorder %s274, %s277
      %p283 = scmp.eq.s32.totalorder %s40, 0
      %p284 = por %p282, %p283
      %p285 = scmp.ne.s32.totalorder %s274, %s277
      %p286 = scmp.eq.s32.totalorder %s45, 1
      %p287 = por %p285, %p286
      %p288 = scmp.ne.s32.totalorder %s277, %s278
      %p289 = scmp.eq.s32.totalorder %s45, 0
      %p290 = por %p288, %p289
      %p291 = scmp.ne.s32.totalorder %s277, %s278
      %p292 = scmp.eq.s32.totalorder %s46, 1
      %p293 = por %p291, %p292
      %p295 = scmp.ne.s32.totalorder %s278, %s294
      %p296 = scmp.eq.s32.totalorder %s46, 0
      %p297 = por %p295, %p296
      %s298 = ssub.s32 %s47, %s59
      %s299 = ssub.s32 %s48, %s55
      %s300 = sor.u32 %s298, %s299
      %p301 = scmp.eq.s32.totalorder %s300, 0
      %s303 = sadd.s32 %s302, 1
      %s304 = scalar_select %p301, %s302, %s303
      %p307 = pneg %p301
      %p308 = scmp.eq.s32.totalorder %s40, 1
      %p309 = por %p307, %p308
      %p310 = scmp.ne.s32.totalorder %s302, %s305
      %p311 = scmp.eq.s32.totalorder %s40, 0
      %p312 = por %p310, %p311
      %p313 = scmp.ne.s32.totalorder %s302, %s305
      %p314 = scmp.eq.s32.totalorder %s45, 1
      %p315 = por %p313, %p314
      %p316 = scmp.ne.s32.totalorder %s305, %s306
      %p317 = scmp.eq.s32.totalorder %s45, 0
      %p318 = por %p316, %p317
      %p319 = scmp.ne.s32.totalorder %s305, %s306
      %p320 = scmp.eq.s32.totalorder %s46, 1
      %p321 = por %p319, %p320
      %p323 = scmp.ne.s32.totalorder %s306, %s322
      %p324 = scmp.eq.s32.totalorder %s46, 0
      %p325 = por %p323, %p324
      %s326 = ssub.s32 %s47, %s59
      %s327 = ssub.s32 %s48, %s55
      %s328 = sor.u32 %s326, %s327
      %p329 = scmp.eq.s32.totalorder %s328, 0
      %s331 = sadd.s32 %s330, 1
      %s332 = scalar_select %p329, %s330, %s331
      %p335 = pneg %p329
      %p336 = scmp.eq.s32.totalorder %s40, 1
      %p337 = por %p335, %p336
      %p338 = scmp.ne.s32.totalorder %s330, %s333
      %p339 = scmp.eq.s32.totalorder %s40, 0
      %p340 = por %p338, %p339
      %p341 = scmp.ne.s32.totalorder %s330, %s333
      %p342 = scmp.eq.s32.totalorder %s45, 1
      %p343 = por %p341, %p342
      %p344 = scmp.ne.s32.totalorder %s333, %s334
      %p345 = scmp.eq.s32.totalorder %s45, 0
      %p346 = por %p344, %p345
      %p347 = scmp.ne.s32.totalorder %s333, %s334
      %p348 = scmp.eq.s32.totalorder %s46, 1
      %p349 = por %p347, %p348
      %p351 = scmp.ne.s32.totalorder %s334, %s350
      %p352 = scmp.eq.s32.totalorder %s46, 0
      %p353 = por %p351, %p352
      %s354 = ssub.s32 %s47, %s59
      %s355 = ssub.s32 %s48, %s55
      %s356 = sor.u32 %s354, %s355
      %p357 = scmp.eq.s32.totalorder %s356, 0
      %s359 = sadd.s32 %s358, 1
      %s360 = scalar_select %p357, %s358, %s359
      %p363 = pneg %p357
      %p364 = scmp.eq.s32.totalorder %s40, 1
      %p365 = por %p363, %p364
      %p366 = scmp.ne.s32.totalorder %s358, %s361
      %p367 = scmp.eq.s32.totalorder %s40, 0
      %p368 = por %p366, %p367
      %p369 = scmp.ne.s32.totalorder %s358, %s361
      %p370 = scmp.eq.s32.totalorder %s45, 1
      %p371 = por %p369, %p370
      %p372 = scmp.ne.s32.totalorder %s361, %s362
      %p373 = scmp.eq.s32.totalorder %s45, 0
      %p374 = por %p372, %p373
      %p375 = scmp.ne.s32.totalorder %s361, %s362
      %p376 = scmp.eq.s32.totalorder %s46, 1
      %p377 = por %p375, %p376
      %p379 = scmp.ne.s32.totalorder %s362, %s378
      %p380 = scmp.eq.s32.totalorder %s46, 0
      %p381 = por %p379, %p380
      %s382 = ssub.s32 %s47, %s59
      %s383 = ssub.s32 %s48, %s55
      %s384 = sor.u32 %s382, %s383
      %p385 = scmp.eq.s32.totalorder %s384, 0
      %s387 = sadd.s32 %s386, 1
      %s388 = scalar_select %p385, %s386, %s387
      %p391 = pneg %p385
      %p392 = scmp.eq.s32.totalorder %s40, 1
      %p393 = por %p391, %p392
      %p394 = scmp.ne.s32.totalorder %s386, %s389
      %p395 = scmp.eq.s32.totalorder %s40, 0
      %p396 = por %p394, %p395
      %p397 = scmp.ne.s32.totalorder %s386, %s389
      %p398 = scmp.eq.s32.totalorder %s45, 1
      %p399 = por %p397, %p398
      %p400 = scmp.ne.s32.totalorder %s389, %s390
      %p401 = scmp.eq.s32.totalorder %s45, 0
      %p402 = por %p400, %p401
      %p403 = scmp.ne.s32.totalorder %s389, %s390
      %p404 = scmp.eq.s32.totalorder %s46, 1
      %p405 = por %p403, %p404
      %p407 = scmp.ne.s32.totalorder %s390, %s406
      %p408 = scmp.eq.s32.totalorder %s46, 0
      %p409 = por %p407, %p408
      %s410 = ssub.s32 %s47, %s59
      %s411 = ssub.s32 %s48, %s55
      %s412 = sor.u32 %s410, %s411
      %p413 = scmp.eq.s32.totalorder %s412, 0
      %s415 = sadd.s32 %s414, 1
      %s416 = scalar_select %p413, %s414, %s415
      %p419 = pneg %p413
      %p420 = scmp.eq.s32.totalorder %s40, 1
      %p421 = por %p419, %p420
      %p422 = scmp.ne.s32.totalorder %s414, %s417
      %p423 = scmp.eq.s32.totalorder %s40, 0
      %p424 = por %p422, %p423
      %p425 = scmp.ne.s32.totalorder %s414, %s417
      %p426 = scmp.eq.s32.totalorder %s45, 1
      %p427 = por %p425, %p426
      %p428 = scmp.ne.s32.totalorder %s417, %s418
      %p429 = scmp.eq.s32.totalorder %s45, 0
      %p430 = por %p428, %p429
      %p431 = scmp.ne.s32.totalorder %s417, %s418
      %p432 = scmp.eq.s32.totalorder %s46, 1
      %p433 = por %p431, %p432
      %p435 = scmp.ne.s32.totalorder %s418, %s434
      %p436 = scmp.eq.s32.totalorder %s46, 0
      %p437 = por %p435, %p436
      %s438 = ssub.s32 %s47, %s59
      %s439 = ssub.s32 %s48, %s55
      %s440 = sor.u32 %s438, %s439
      %p441 = scmp.eq.s32.totalorder %s440, 0
      %s443 = sadd.s32 %s442, 1
      %s444 = scalar_select %p441, %s442, %s443
      %p447 = pneg %p441
      %p448 = scmp.eq.s32.totalorder %s40, 1
      %p449 = por %p447, %p448
      %p450 = scmp.ne.s32.totalorder %s442, %s445
      %p451 = scmp.eq.s32.totalorder %s40, 0
      %p452 = por %p450, %p451
      %p453 = scmp.ne.s32.totalorder %s442, %s445
      %p454 = scmp.eq.s32.totalorder %s45, 1
      %p455 = por %p453, %p454
      %p456 = scmp.ne.s32.totalorder %s445, %s446
      %p457 = scmp.eq.s32.totalorder %s45, 0
      %p458 = por %p456, %p457
      %p459 = scmp.ne.s32.totalorder %s445, %s446
      %p460 = scmp.eq.s32.totalorder %s46, 1
      %p461 = por %p459, %p460
      %p463 = scmp.ne.s32.totalorder %s446, %s462
      %p464 = scmp.eq.s32.totalorder %s46, 0
      %p465 = por %p463, %p464
      %p466 = scmp.le.s32.totalorder 1, %s40
      %p467 = scmp.lt.s32.totalorder %s40, 3
      %p468 = pnand %p466, %p467
      %p469 = pneg %p468
      // Predicated region
      $region9: #{tpu_custom_call.1} parent=5 // pred_check
        _
      $region10: #{tpu_custom_call.1} parent=5 // pred_check_branch
        %471 = sbr.rel (%p468) target = $region12
      $region11: #{tpu_custom_call.1} parent=5 // pred_region
        %s472 = ssub.s32 %s40, 1
        // Predicated region
        $region13: #{tpu_custom_call.1} parent=11 // pred_check
          %p473 = pneg %p157
        $region14: #{tpu_custom_call.1} parent=11 // pred_check_branch
          %475 = sbr.rel (%p473) target = $region16
        $region15: #{tpu_custom_call.1} parent=11 // pred_region
          _
        $region16: #{tpu_custom_call.1} parent=11 // pred_fallthru
          _
        // Predicated region
        $region17: #{tpu_custom_call.1} parent=11 // pred_check
          %p476 = pneg %p178
        $region18: #{tpu_custom_call.1} parent=11 // pred_check_branch
          %478 = sbr.rel (%p476) target = $region20
        $region19: #{tpu_custom_call.1} parent=11 // pred_region
          _
        $region20: #{tpu_custom_call.1} parent=11 // pred_fallthru
          _
        // Predicated region
        $region21: #{tpu_custom_call.1} parent=11 // pred_check
          %p479 = pneg %p199
        $region22: #{tpu_custom_call.1} parent=11 // pred_check_branch
          %481 = sbr.rel (%p479) target = $region24
        $region23: #{tpu_custom_call.1} parent=11 // pred_region
          %483 = vsyncadd [#allocation6], 0
          %s485 = sshll.u32 %s5, 4
          %s486 = int_to_ptr.hbm [resolvable:$true] %s485
          %s487 = sshll.u32 [#allocation7], 4
          %s488 = int_to_ptr.vmem [resolvable:$true] %s487
          %490 = dma.hbm_to_vmem [thread:$0]  %s486, 128, %s488, [#allocation6]
        $region24: #{tpu_custom_call.1} parent=11 // pred_fallthru
          _
        // Predicated region
        $region25: #{tpu_custom_call.1} parent=11 // pred_check
          %p491 = pneg %p220
        $region26: #{tpu_custom_call.1} parent=11 // pred_check_branch
          %493 = sbr.rel (%p491) target = $region28
        $region27: #{tpu_custom_call.1} parent=11 // pred_region
          _
        $region28: #{tpu_custom_call.1} parent=11 // pred_fallthru
          _
        // Predicated region
        $region29: #{tpu_custom_call.1} parent=11 // pred_check
          %p494 = pneg %p241
        $region30: #{tpu_custom_call.1} parent=11 // pred_check_branch
          %496 = sbr.rel (%p494) target = $region32
        $region31: #{tpu_custom_call.1} parent=11 // pred_region
          _
        $region32: #{tpu_custom_call.1} parent=11 // pred_fallthru
          _
        // Predicated region
        $region33: #{tpu_custom_call.1} parent=11 // pred_check
          %p497 = pneg %p262
        $region34: #{tpu_custom_call.1} parent=11 // pred_check_branch
          %499 = sbr.rel (%p497) target = $region36
        $region35: #{tpu_custom_call.1} parent=11 // pred_region
          _
        $region36: #{tpu_custom_call.1} parent=11 // pred_fallthru
          _
      $region12: #{tpu_custom_call.1} parent=5 // pred_fallthru
        _
      %p500 = scmp.lt.s32.totalorder %s40, 2
      // Predicated region
      $region37: #{tpu_custom_call.1} parent=5 // pred_check
        %p501 = pneg %p500
      $region38: #{tpu_custom_call.1} parent=5 // pred_check_branch
        %503 = sbr.rel (%p501) target = $region40
      $region39: #{tpu_custom_call.1} parent=5 // pred_region
        // Predicated region
        $region41: #{tpu_custom_call.1} parent=39 // pred_check
          %p504 = pneg %p74
        $region42: #{tpu_custom_call.1} parent=39 // pred_check_branch
          %506 = sbr.rel (%p504) target = $region44
        $region43: #{tpu_custom_call.1} parent=39 // pred_region
          %s507 = smul.u32 2, %s48
          %p508 = scmp.lt.s32.totalorder %s47, 1
          %s509 = scalar_select %p508, %s47, 1
          %p510 = scmp.lt.s32.totalorder %s507, 1
          %s511 = scalar_select %p510, %s507, 1
          %s512 = smul.addr %s509, 2
          %s513 = sadd.s32 %s511, %s512
          %s514 = smul.addr %s513, 8
          %s515 = scalar_lea.vmem %s0, %s514
          %s516 = smul.u32 2, %s48
        $region44: #{tpu_custom_call.1} parent=39 // pred_fallthru
          _
        // Predicated region
        $region45: #{tpu_custom_call.1} parent=39 // pred_check
          %p517 = pneg %p102
        $region46: #{tpu_custom_call.1} parent=39 // pred_check_branch
          %519 = sbr.rel (%p517) target = $region48
        $region47: #{tpu_custom_call.1} parent=39 // pred_region
          %s520 = sand.u32 %s92, 1
          %s521 = scalar_lea.sflag [#allocation3], %s520
          %s522 = sand.u32 %s92, 1
          %s523 = smul.addr %s522, 16
          %s524 = scalar_lea.vmem [#allocation2], %s523
          %s525 = smul.u32 2, %s48
          %527 = vsyncadd %s521, 0
          %s528 = smul.addr %s47, 2
          %s529 = sadd.s32 %s525, %s528
          %s530 = smul.addr %s529, 8
          %s531 = scalar_lea.hbm %s1, %s530
          %s533 = sshll.u32 %s531, 4
          %s534 = int_to_ptr.hbm [resolvable:$true] %s533
          %s535 = sshll.u32 %s524, 4
          %s536 = int_to_ptr.vmem [resolvable:$true] %s535
          %538 = dma.hbm_to_vmem [thread:$0]  %s534, 256, %s536, %s521
        $region48: #{tpu_custom_call.1} parent=39 // pred_fallthru
          _
        // Predicated region
        $region49: #{tpu_custom_call.1} parent=39 // pred_check
          %p539 = pneg %p130
        $region50: #{tpu_custom_call.1} parent=39 // pred_check_branch
          %541 = sbr.rel (%p539) target = $region52
        $region51: #{tpu_custom_call.1} parent=39 // pred_region
          %s542 = sand.u32 %s40, 1
          %s543 = scalar_lea.sflag [#allocation6], %s542
          %s544 = sand.u32 %s120, 1
          %s545 = smul.addr %s544, 8
          %s546 = scalar_lea.vmem [#allocation5], %s545
          %s547 = smul.u32 2, %s48
          %549 = vsyncadd %s543, 0
          %s550 = smul.addr %s47, 2
          %s551 = sadd.s32 %s547, %s550
          %s552 = smul.addr %s551, 4
          %s553 = scalar_lea.hbm %s2, %s552
          %s555 = sshll.u32 %s553, 4
          %s556 = int_to_ptr.hbm [resolvable:$true] %s555
          %s557 = sshll.u32 %s546, 4
          %s558 = int_to_ptr.vmem [resolvable:$true] %s557
          %560 = dma.hbm_to_vmem [thread:$0]  %s556, 128, %s558, %s543
        $region52: #{tpu_custom_call.1} parent=39 // pred_fallthru
          _
      $region40: #{tpu_custom_call.1} parent=5 // pred_fallthru
        _
      %p561 = scmp.le.s32.totalorder 1, %s40
      %p562 = scmp.lt.s32.totalorder %s40, 3
      %p563 = pnand %p561, %p562
      %p564 = pneg %p563
      // Predicated region
      $region53: #{tpu_custom_call.1} parent=5 // pred_check
        _
      $region54: #{tpu_custom_call.1} parent=5 // pred_check_branch
        %566 = sbr.rel (%p563) target = $region56
      $region55: #{tpu_custom_call.1} parent=5 // pred_region
        %s567 = ssub.s32 %s40, 1
        %s568 = sand.u32 %s95, 1
        %s569 = scalar_lea.sflag [#allocation3], %s568
        %s570 = sand.u32 %s95, 1
        %s571 = smul.addr %s570, 16
        %s572 = scalar_lea.vmem [#allocation2], %s571
        // Predicated region
        $region57: #{tpu_custom_call.1} parent=55 // pred_check
          %p573 = pneg %p108
        $region58: #{tpu_custom_call.1} parent=55 // pred_check_branch
          %575 = sbr.rel (%p573) target = $region60
        $region59: #{tpu_custom_call.1} parent=55 // pred_region
          %577 = dma.done %s569, 256
        $region60: #{tpu_custom_call.1} parent=55 // pred_fallthru
          _
        %s578 = sand.u32 %s45, 1
        %s579 = scalar_lea.sflag [#allocation6], %s578
        %s580 = sand.u32 %s123, 1
        %s581 = smul.addr %s580, 8
        %s582 = scalar_lea.vmem [#allocation5], %s581
        // Predicated region
        $region61: #{tpu_custom_call.1} parent=55 // pred_check
          %p583 = pneg %p136
        $region62: #{tpu_custom_call.1} parent=55 // pred_check_branch
          %585 = sbr.rel (%p583) target = $region64
        $region63: #{tpu_custom_call.1} parent=55 // pred_region
          %587 = dma.done %s579, 128
        $region64: #{tpu_custom_call.1} parent=55 // pred_fallthru
          _
        // Predicated region
        $region65: #{tpu_custom_call.1} parent=55 // pred_check
          %p588 = pneg %p199
        $region66: #{tpu_custom_call.1} parent=55 // pred_check_branch
          %590 = sbr.rel (%p588) target = $region68
        $region67: #{tpu_custom_call.1} parent=55 // pred_region
          %592 = dma.done [#allocation6], 128
        $region68: #{tpu_custom_call.1} parent=55 // pred_fallthru
          _
        %s593 = smul.u32 2, %s50
        %p594 = scmp.lt.s32.totalorder %s49, 1
        %s595 = scalar_select %p594, %s49, 1
        %p596 = scmp.lt.s32.totalorder %s593, 1
        %s597 = scalar_select %p596, %s593, 1
        %s598 = smul.addr %s595, 2
        %s599 = sadd.s32 %s597, %s598
        %s600 = smul.addr %s599, 8
        %s601 = scalar_lea.vmem %s0, %s600
        %p602 = pneg %p80
        %p603 = pneg %p77
        %s604 = sand.u32 %s95, 1
        %s605 = scalar_lea.sflag [#allocation3], %s604
        %s606 = sand.u32 %s95, 1
        %s607 = smul.addr %s606, 16
        %s608 = scalar_lea.vmem [#allocation2], %s607
        %p609 = pneg %p108
        %p610 = pneg %p105
        %s611 = sand.u32 %s45, 1
        %s612 = scalar_lea.sflag [#allocation6], %s611
        %s613 = sand.u32 %s123, 1
        %s614 = smul.addr %s613, 8
        %s615 = scalar_lea.vmem [#allocation5], %s614
        %p616 = pneg %p136
        %p617 = pneg %p133
        %p618 = pneg %p157
        %p619 = pneg %p154
        %p620 = pneg %p178
        %p621 = pneg %p175
        %p622 = pneg %p199
        %p623 = pneg %p196
        %p624 = pneg %p220
        %p625 = pneg %p217
        %p626 = pneg %p241
        %p627 = pneg %p238
        %p628 = pneg %p262
        %p629 = pneg %p259
        %p630 = pneg %p290
        %p631 = pneg %p287
        %s632 = sand.u32 %s277, 1
        %s633 = scalar_lea.sflag [#allocation4], %s632
        %s634 = sand.u32 %s277, 1
        %s635 = smul.addr %s634, 32
        %s636 = scalar_lea.vmem [#allocation8], %s635
        %p637 = pneg %p318
        %p638 = pneg %p315
        %s639 = sand.u32 %s45, 1
        %s640 = scalar_lea.sflag [#allocation10], %s639
        %s641 = sand.u32 %s305, 1
        %s642 = smul.addr %s641, 8
        %s643 = scalar_lea.vmem [#allocation9], %s642
        %p644 = pneg %p346
        %p645 = pneg %p343
        %s646 = sand.u32 %s45, 1
        %s647 = scalar_lea.sflag [#allocation10], %s646
        %s648 = sand.u32 %s333, 1
        %s649 = smul.addr %s648, 8
        %s650 = scalar_lea.vmem [#allocation11], %s649
        %p651 = pneg %p374
        %p652 = pneg %p371
        %s653 = sand.u32 %s45, 1
        %s654 = scalar_lea.sflag [#allocation13], %s653
        %s655 = sand.u32 %s361, 1
        %s656 = smul.addr %s655, 8
        %s657 = scalar_lea.vmem [#allocation12], %s656
        %p658 = pneg %p402
        %p659 = pneg %p399
        %s660 = sand.u32 %s45, 1
        %s661 = scalar_lea.sflag [#allocation13], %s660
        %s662 = sand.u32 %s389, 1
        %s663 = smul.addr %s662, 8
        %s664 = scalar_lea.vmem [#allocation14], %s663
        %p665 = pneg %p430
        %p666 = pneg %p427
        %s667 = sand.u32 %s45, 1
        %s668 = scalar_lea.sflag [#allocation16], %s667
        %s669 = sand.u32 %s417, 1
        %s670 = smul.addr %s669, 8
        %s671 = scalar_lea.vmem [#allocation15], %s670
        %p672 = pneg %p458
        %p673 = pneg %p455
        %s674 = sand.u32 %s45, 1
        %s675 = scalar_lea.sflag [#allocation16], %s674
        %s676 = sand.u32 %s445, 1
        %s677 = smul.addr %s676, 8
        %s678 = scalar_lea.vmem [#allocation17], %s677
        %s679 = smul.u32 2, %s50
        %p680 = scmp.lt.s32.totalorder %s49, 1
        %s681 = scalar_select %p680, %s49, 1
        %p682 = scmp.lt.s32.totalorder %s679, 1
        %s683 = scalar_select %p682, %s679, 1
        %s684 = smul.addr %s681, 2
        %s685 = sadd.s32 %s683, %s684
        %s686 = smul.addr %s685, 8
        %s687 = scalar_lea.vmem %s0, %s686
        %s688 = smul.u32 2, %s50
        %s689 = smul.u32 2, %s50
        %s690 = smul.u32 2, %s50
        %s691 = smul.u32 2, %s50
        %s692 = smul.u32 2, %s50
        %s693 = smul.u32 2, %s50
        %s694 = smul.u32 2, %s50
        %s695 = smul.u32 2, %s50
        %s696 = smul.u32 2, %s50
        %s697 = smul.u32 2, %s50
        %v698 = vld [vmem:[%s687] sm:$0xff]
        %v699 = vld [vmem:[%s687 + $0x8] sm:$0xff]
        %v700 = vld [vmem:[%s572] sm:$0xff]
        %v701 = vld [vmem:[%s572 + $0x8] sm:$0xff]
        %v702 = vrot.slane %v700, 4
        %v703 = vadd.f32 %v700, %v702
        %v704 = vrot.slane %v703, 2
        %v705 = vadd.f32 %v703, %v704
        %v706 = vrot.slane %v705, 1
        %v707 = vadd.f32 %v705, %v706
        %v708 = vrot.slane %v701, 4
        %v709 = vadd.f32 %v701, %v708
        %v710 = vrot.slane %v709, 2
        %v711 = vadd.f32 %v709, %v710
        %v712 = vrot.slane %v711, 1
        %v713 = vadd.f32 %v711, %v712
        %v714 = vrcp.pop 8.0
        %v715 = vmul.f32 8.0, %v714
        %v716 = vsub.f32 1.0, %v715
        %v717 = vmul.f32 %v714, %v716
        %v718 = vadd.f32 %v714, %v717
        %vm719 = vweird.f32 %v714
        %v720 = vsel %vm719, %v714, %v718
        %v721 = vmul.f32 %v707, %v720
        %v722 = vmul.f32 %v713, %v720
        %v723 = vsub.f32 %v700, %v721
        %v724 = vsub.f32 %v701, %v722
        %v725 = vmul.f32 %v723, %v723
        %v726 = vmul.f32 %v724, %v724
        %v727 = vrot.slane %v725, 4
        %v728 = vadd.f32 %v725, %v727
        %v729 = vrot.slane %v728, 2
        %v730 = vadd.f32 %v728, %v729
        %v731 = vrot.slane %v730, 1
        %v732 = vadd.f32 %v730, %v731
        %v733 = vrot.slane %v726, 4
        %v734 = vadd.f32 %v726, %v733
        %v735 = vrot.slane %v734, 2
        %v736 = vadd.f32 %v734, %v735
        %v737 = vrot.slane %v736, 1
        %v738 = vadd.f32 %v736, %v737
        %v739 = vmul.f32 %v732, %v720
        %v740 = vmul.f32 %v738, %v720
        %v741 = vadd.f32 %v739, 1e-05
        %v742 = vadd.f32 %v740, 1e-05
        %v743 = vrsqrt.pop %v741
        %v744 = vmul.f32 %v743, %v741
        %v745 = vmul.f32 %v744, %v743
        %v746 = vmul.f32 0.5, %v745
        %v747 = vsub.f32 1.5, %v746
        %v748 = vmul.f32 %v743, %v747
        %vm749 = vweird.f32 %v741
        %vm750 = vweird.f32 %v743
        %vm751 = vmor %vm749, %vm750
        %v752 = vsel %vm751, %v743, %v748
        %v753 = vrsqrt.pop %v742
        %v754 = vmul.f32 %v753, %v742
        %v755 = vmul.f32 %v754, %v753
        %v756 = vmul.f32 0.5, %v755
        %v757 = vsub.f32 1.5, %v756
        %v758 = vmul.f32 %v753, %v757
        %vm759 = vweird.f32 %v742
        %vm760 = vweird.f32 %v753
        %vm761 = vmor %vm759, %vm760
        %v762 = vsel %vm761, %v753, %v758
        %v763 = vmul.f32 %v723, %v752
        %v764 = vmul.f32 %v724, %v762
        %v765 = vxor.u32 %v763, 2147483648
        %v766 = vxor.u32 %v764, 2147483648
        %v767 = vmul.f32 %v765, 1.442695
        %v768 = vpow.pop %v767
        %v769 = vmul.f32 %v766, 1.442695
        %v770 = vpow.pop %v769
        %v771 = vadd.f32 %v768, 1.0
        %v772 = vadd.f32 %v770, 1.0
        %v773 = vrcp.pop %v771
        %v774 = vmul.f32 %v771, %v773
        %v775 = vsub.f32 1.0, %v774
        %v776 = vmul.f32 %v773, %v775
        %v777 = vadd.f32 %v773, %v776
        %vm778 = vweird.f32 %v771
        %vm779 = vweird.f32 %v773
        %vm780 = vmor %vm778, %vm779
        %v781 = vsel %vm780, %v773, %v777
        %v782 = vand.u32 2147483647, %v771
        %vm783 = vcmp.eq.f32.partialorder %v782, 8.507059e+37
        %v784 = vand.u32 %v771, 2147483648
        %v785 = vor.u32 1.1754944e-38, %v784
        %v786 = vsel %vm783, %v785, %v781
        %v787 = vmul.f32 1.0, %v786
        %v788 = vrcp.pop %v772
        %v789 = vmul.f32 %v772, %v788
        %v790 = vsub.f32 1.0, %v789
        %v791 = vmul.f32 %v788, %v790
        %v792 = vadd.f32 %v788, %v791
        %vm793 = vweird.f32 %v772
        %vm794 = vweird.f32 %v788
        %vm795 = vmor %vm793, %vm794
        %v796 = vsel %vm795, %v788, %v792
        %v797 = vand.u32 2147483647, %v772
        %vm798 = vcmp.eq.f32.partialorder %v797, 8.507059e+37
        %v799 = vand.u32 %v772, 2147483648
        %v800 = vor.u32 1.1754944e-38, %v799
        %v801 = vsel %vm798, %v800, %v796
        %v802 = vmul.f32 1.0, %v801
        %v803 = vmul.f32 %v763, %v787
        %v804 = vmul.f32 %v764, %v802
        %v805 = vld [vmem:[%s3] sm:$0xff]
        %v806 = vld [vmem:[%s4] sm:$0xff]
        %808 = vset.pattern.permute.xlu0 0
        %809 = vperm.xlu0 %808, %v806
        %v810 = vpop.permute.xlu0 %809
        %vm812 = vcmask 64512
        %v814 = vsel %vm812, %v805, 0
        %816 = vmatpush.msra.mxu0 0.0
        %817 = vmatpush.msra.mxu0 0.0
        %818 = vmatpush.msra.mxu0 0.0
        %819 = vmatpush.msra.mxu0 0.0
        %820 = vmatpush.msra.mxu0 0.0
        %821 = vmatpush.msra.mxu0 0.0
        %822 = vmatpush.msra.mxu0 0.0
        %823 = vmatpush.msra.mxu0 0.0
        %824 = vmatpush.msra.mxu0 0.0
        %825 = vmatpush.msra.mxu0 0.0
        %826 = vmatpush.msra.mxu0 0.0
        %827 = vmatpush.msra.mxu0 0.0
        %828 = vmatpush.msra.mxu0 0.0
        %829 = vmatpush.msra.mxu0 0.0
        %830 = vmatpush.msra.mxu0 0.0
        %831 = vmatpush.msra.mxu0 %v803
        %832 = vmatmul.f32.gmra.mxu0 %v814
        %v833 = vpop.f32.mrf.mxu0
        %v834 = vadd.f32 %v810, %v833
        %835 = vdwg.mxu0
        %836 = vmatpush.msra.mxu0 0.0
        %837 = vmatpush.msra.mxu0 0.0
        %838 = vmatpush.msra.mxu0 0.0
        %839 = vmatpush.msra.mxu0 0.0
        %840 = vmatpush.msra.mxu0 0.0
        %841 = vmatpush.msra.mxu0 0.0
        %842 = vmatpush.msra.mxu0 0.0
        %843 = vmatpush.msra.mxu0 0.0
        %844 = vmatpush.msra.mxu0 0.0
        %845 = vmatpush.msra.mxu0 0.0
        %846 = vmatpush.msra.mxu0 0.0
        %847 = vmatpush.msra.mxu0 0.0
        %848 = vmatpush.msra.mxu0 0.0
        %849 = vmatpush.msra.mxu0 0.0
        %850 = vmatpush.msra.mxu0 0.0
        %851 = vmatpush.msra.mxu0 %v804
        %852 = vmatmul.f32.gmra.mxu0 %v814
        %v853 = vpop.f32.mrf.mxu0
        %v854 = vadd.f32 %v810, %v853
        %855 = vdwg.mxu0
        %v856 = vmul.f32 %v834, 0.5
        %v857 = vmul.f32 %v854, 0.5
        %v858 = vmul.f32 %v856, 1.442695
        %v859 = vpow.pop %v858
        %v860 = vmul.f32 %v857, 1.442695
        %v861 = vpow.pop %v860
        %v864 = vrot.slane %v854, 4
        %vm865 = vcmask 1043456
        %v866 = vsel %vm865, %v834, %v864
        %868 = vst [vmem:[%s657] sm:$0xff] %v866
        %871 = vst.sshfl [vmem:[#allocation1] sm:$0xff pattern:$0x75316420] %v859
        %872 = vst.sshfl [vmem:[#allocation1 + $0x8] sm:$0xff pattern:$0x75316420] %v861
        %s873 = scalar_lea.vmem [#allocation1], 1
        %v874 = vld [vmem:[%s873] ss:$2 sm:$0xff]
        %876 = vst [vmem:[%s664] sm:$0xff] %v874
        %v877 = vrot.slane %v698, 4
        %v878 = vadd.f32 %v698, %v877
        %v879 = vrot.slane %v878, 2
        %v880 = vadd.f32 %v878, %v879
        %v881 = vrot.slane %v880, 1
        %v882 = vadd.f32 %v880, %v881
        %v883 = vrot.slane %v699, 4
        %v884 = vadd.f32 %v699, %v883
        %v885 = vrot.slane %v884, 2
        %v886 = vadd.f32 %v884, %v885
        %v887 = vrot.slane %v886, 1
        %v888 = vadd.f32 %v886, %v887
        %v889 = vmul.f32 %v882, %v720
        %v890 = vmul.f32 %v888, %v720
        %v891 = vsub.f32 %v698, %v889
        %v892 = vsub.f32 %v699, %v890
        %v893 = vmul.f32 %v891, %v891
        %v894 = vmul.f32 %v892, %v892
        %v895 = vrot.slane %v893, 4
        %v896 = vadd.f32 %v893, %v895
        %v897 = vrot.slane %v896, 2
        %v898 = vadd.f32 %v896, %v897
        %v899 = vrot.slane %v898, 1
        %v900 = vadd.f32 %v898, %v899
        %v901 = vrot.slane %v894, 4
        %v902 = vadd.f32 %v894, %v901
        %v903 = vrot.slane %v902, 2
        %v904 = vadd.f32 %v902, %v903
        %v905 = vrot.slane %v904, 1
        %v906 = vadd.f32 %v904, %v905
        %v907 = vmul.f32 %v900, %v720
        %v908 = vmul.f32 %v906, %v720
        %v909 = vadd.f32 %v907, 1e-05
        %v910 = vadd.f32 %v908, 1e-05
        %v911 = vrsqrt.pop %v909
        %v912 = vmul.f32 %v911, %v909
        %v913 = vmul.f32 %v912, %v911
        %v914 = vmul.f32 0.5, %v913
        %v915 = vsub.f32 1.5, %v914
        %v916 = vmul.f32 %v911, %v915
        %vm917 = vweird.f32 %v909
        %vm918 = vweird.f32 %v911
        %vm919 = vmor %vm917, %vm918
        %v920 = vsel %vm919, %v911, %v916
        %v921 = vrsqrt.pop %v910
        %v922 = vmul.f32 %v921, %v910
        %v923 = vmul.f32 %v922, %v921
        %v924 = vmul.f32 0.5, %v923
        %v925 = vsub.f32 1.5, %v924
        %v926 = vmul.f32 %v921, %v925
        %vm927 = vweird.f32 %v910
        %vm928 = vweird.f32 %v921
        %vm929 = vmor %vm927, %vm928
        %v930 = vsel %vm929, %v921, %v926
        %v931 = vmul.f32 %v891, %v920
        %v932 = vmul.f32 %v892, %v930
        %v933 = vxor.u32 %v931, 2147483648
        %v934 = vxor.u32 %v932, 2147483648
        %v935 = vmul.f32 %v933, 1.442695
        %v936 = vpow.pop %v935
        %v937 = vmul.f32 %v934, 1.442695
        %v938 = vpow.pop %v937
        %v939 = vadd.f32 %v936, 1.0
        %v940 = vadd.f32 %v938, 1.0
        %v941 = vrcp.pop %v939
        %v942 = vmul.f32 %v939, %v941
        %v943 = vsub.f32 1.0, %v942
        %v944 = vmul.f32 %v941, %v943
        %v945 = vadd.f32 %v941, %v944
        %vm946 = vweird.f32 %v939
        %vm947 = vweird.f32 %v941
        %vm948 = vmor %vm946, %vm947
        %v949 = vsel %vm948, %v941, %v945
        %v950 = vand.u32 2147483647, %v939
        %vm951 = vcmp.eq.f32.partialorder %v950, 8.507059e+37
        %v952 = vand.u32 %v939, 2147483648
        %v953 = vor.u32 1.1754944e-38, %v952
        %v954 = vsel %vm951, %v953, %v949
        %v955 = vmul.f32 1.0, %v954
        %v956 = vrcp.pop %v940
        %v957 = vmul.f32 %v940, %v956
        %v958 = vsub.f32 1.0, %v957
        %v959 = vmul.f32 %v956, %v958
        %v960 = vadd.f32 %v956, %v959
        %vm961 = vweird.f32 %v940
        %vm962 = vweird.f32 %v956
        %vm963 = vmor %vm961, %vm962
        %v964 = vsel %vm963, %v956, %v960
        %v965 = vand.u32 2147483647, %v940
        %vm966 = vcmp.eq.f32.partialorder %v965, 8.507059e+37
        %v967 = vand.u32 %v940, 2147483648
        %v968 = vor.u32 1.1754944e-38, %v967
        %v969 = vsel %vm966, %v968, %v964
        %v970 = vmul.f32 1.0, %v969
        %v971 = vmul.f32 %v931, %v955
        %v972 = vmul.f32 %v932, %v970
        %v973 = vld [vmem:[#allocation7] sm:$0xff]
        %v974 = vld [vmem:[%s6] sm:$0xff]
        %976 = vset.pattern.permute.xlu0 0
        %977 = vperm.xlu0 %976, %v974
        %v978 = vpop.permute.xlu0 %977
        %v981 = vsel %vm812, %v973, 0
        %983 = vmatpush.msra.mxu0 0.0
        %984 = vmatpush.msra.mxu0 0.0
        %985 = vmatpush.msra.mxu0 0.0
        %986 = vmatpush.msra.mxu0 0.0
        %987 = vmatpush.msra.mxu0 0.0
        %988 = vmatpush.msra.mxu0 0.0
        %989 = vmatpush.msra.mxu0 0.0
        %990 = vmatpush.msra.mxu0 0.0
        %991 = vmatpush.msra.mxu0 0.0
        %992 = vmatpush.msra.mxu0 0.0
        %993 = vmatpush.msra.mxu0 0.0
        %994 = vmatpush.msra.mxu0 0.0
        %995 = vmatpush.msra.mxu0 0.0
        %996 = vmatpush.msra.mxu0 0.0
        %997 = vmatpush.msra.mxu0 0.0
        %998 = vmatpush.msra.mxu0 %v971
        %999 = vmatmul.f32.gmra.mxu0 %v981
        %v1000 = vpop.f32.mrf.mxu0
        %v1001 = vadd.f32 %v978, %v1000
        %1002 = vdwg.mxu0
        %1003 = vmatpush.msra.mxu0 0.0
        %1004 = vmatpush.msra.mxu0 0.0
        %1005 = vmatpush.msra.mxu0 0.0
        %1006 = vmatpush.msra.mxu0 0.0
        %1007 = vmatpush.msra.mxu0 0.0
        %1008 = vmatpush.msra.mxu0 0.0
        %1009 = vmatpush.msra.mxu0 0.0
        %1010 = vmatpush.msra.mxu0 0.0
        %1011 = vmatpush.msra.mxu0 0.0
        %1012 = vmatpush.msra.mxu0 0.0
        %1013 = vmatpush.msra.mxu0 0.0
        %1014 = vmatpush.msra.mxu0 0.0
        %1015 = vmatpush.msra.mxu0 0.0
        %1016 = vmatpush.msra.mxu0 0.0
        %1017 = vmatpush.msra.mxu0 0.0
        %1018 = vmatpush.msra.mxu0 %v972
        %1019 = vmatmul.f32.gmra.mxu0 %v981
        %v1020 = vpop.f32.mrf.mxu0
        %v1021 = vadd.f32 %v978, %v1020
        %1022 = vdwg.mxu0
        %v1023 = vadd.f32 %v1001, %v834
        %v1024 = vadd.f32 %v1021, %v854
        %v1025 = vmul.f32 %v1023, 0.5
        %v1026 = vmul.f32 %v1024, 0.5
        %v1027 = vmul.f32 %v1025, 1.442695
        %v1028 = vpow.pop %v1027
        %v1029 = vmul.f32 %v1026, 1.442695
        %v1030 = vpow.pop %v1029
        %v1033 = vrot.slane %v1024, 4
        %v1034 = vsel %vm865, %v1023, %v1033
        %1036 = vst [vmem:[%s671] sm:$0xff] %v1034
        %1039 = vst.sshfl [vmem:[#allocation1] sm:$0xff pattern:$0x75316420] %v1028
        %1040 = vst.sshfl [vmem:[#allocation1 + $0x8] sm:$0xff pattern:$0x75316420] %v1030
        %s1041 = scalar_lea.vmem [#allocation1], 1
        %v1042 = vld [vmem:[%s1041] ss:$2 sm:$0xff]
        %1044 = vst [vmem:[%s678] sm:$0xff] %v1042
        %v1045 = vld [vmem:[%s582] sm:$0xff]
        %s1047 = scalar_lea.vmem [#allocation1], 1
        %1048 = vst [vmem:[%s1047] ss:$2 sm:$0xff] %v1045
        %v1049 = vld.sshfl [vmem:[#allocation1] sm:$0xff pattern:$0x75316420]
        %v1050 = vld.sshfl [vmem:[#allocation1 + $0x8] sm:$0xff pattern:$0x75316420]
        %v1053 = vmul.f32 %v1028, %v1049
        %v1054 = vmul.f32 %v1030, %v1050
        %v1057 = vrot.slane %v1053, 4
        %v1058 = vrot.slane %v1054, 4
        %v1061 = vadd.f32 %v1023, %v1057
        %v1062 = vadd.f32 %v1024, %v1058
        %v1065 = vrot.slane %v1062, 4
        %v1066 = vsel %vm865, %v1061, %v1065
        %1068 = vst [vmem:[%s643] sm:$0xff] %v1066
        %v1069 = vsub.f32 %v834, %v1023
        %v1070 = vsub.f32 %v854, %v1024
        %v1071 = vmul.f32 %v1069, 0.5
        %v1072 = vmul.f32 %v1070, 0.5
        %v1073 = vmul.f32 %v1028, %v1028
        %v1074 = vmul.f32 %v1030, %v1030
        %v1075 = vsub.f32 %v1023, %v834
        %v1076 = vsub.f32 %v1024, %v854
        %v1077 = vmul.f32 %v1075, %v1075
        %v1078 = vmul.f32 %v1076, %v1076
        %v1081 = vrot.slane %v1077, 4
        %v1082 = vrot.slane %v1078, 4
        %v1085 = vadd.f32 %v1073, %v1081
        %v1086 = vadd.f32 %v1074, %v1082
        %v1087 = vsub.f32 0.0, %v834
        %v1088 = vsub.f32 0.0, %v854
        %v1089 = vmul.f32 %v1087, 1.442695
        %v1090 = vpow.pop %v1089
        %v1091 = vmul.f32 %v1088, 1.442695
        %v1092 = vpow.pop %v1091
        %v1093 = vmul.f32 %v1090, 0.5
        %v1094 = vmul.f32 %v1092, 0.5
        %v1095 = vmul.f32 %v1085, %v1093
        %v1096 = vmul.f32 %v1086, %v1094
        %v1097 = vadd.f32 %v1071, %v1095
        %v1098 = vadd.f32 %v1072, %v1096
        %v1099 = vsub.f32 %v1097, 0.5
        %v1100 = vsub.f32 %v1098, 0.5
        %1103 = vst.sshfl [vmem:[#allocation1] sm:$0xff pattern:$0x75316420] %v1099
        %1104 = vst.sshfl [vmem:[#allocation1 + $0x8] sm:$0xff pattern:$0x75316420] %v1100
        %s1105 = scalar_lea.vmem [#allocation1], 1
        %v1106 = vld [vmem:[%s1105] ss:$2 sm:$0xff]
        %1108 = vst [vmem:[%s650] sm:$0xff] %v1106
        %v1109 = vxor.u32 %v1061, 2147483648
        %v1110 = vxor.u32 %v1062, 2147483648
        %v1111 = vmul.f32 %v1109, 1.442695
        %v1112 = vpow.pop %v1111
        %v1113 = vmul.f32 %v1110, 1.442695
        %v1114 = vpow.pop %v1113
        %v1115 = vadd.f32 %v1112, 1.0
        %v1116 = vadd.f32 %v1114, 1.0
        %v1117 = vrcp.pop %v1115
        %v1118 = vmul.f32 %v1115, %v1117
        %v1119 = vsub.f32 1.0, %v1118
        %v1120 = vmul.f32 %v1117, %v1119
        %v1121 = vadd.f32 %v1117, %v1120
        %vm1122 = vweird.f32 %v1115
        %vm1123 = vweird.f32 %v1117
        %vm1124 = vmor %vm1122, %vm1123
        %v1125 = vsel %vm1124, %v1117, %v1121
        %v1126 = vand.u32 2147483647, %v1115
        %vm1127 = vcmp.eq.f32.partialorder %v1126, 8.507059e+37
        %v1128 = vand.u32 %v1115, 2147483648
        %v1129 = vor.u32 1.1754944e-38, %v1128
        %v1130 = vsel %vm1127, %v1129, %v1125
        %v1131 = vmul.f32 1.0, %v1130
        %v1132 = vrcp.pop %v1116
        %v1133 = vmul.f32 %v1116, %v1132
        %v1134 = vsub.f32 1.0, %v1133
        %v1135 = vmul.f32 %v1132, %v1134
        %v1136 = vadd.f32 %v1132, %v1135
        %vm1137 = vweird.f32 %v1116
        %vm1138 = vweird.f32 %v1132
        %vm1139 = vmor %vm1137, %vm1138
        %v1140 = vsel %vm1139, %v1132, %v1136
        %v1141 = vand.u32 2147483647, %v1116
        %vm1142 = vcmp.eq.f32.partialorder %v1141, 8.507059e+37
        %v1143 = vand.u32 %v1116, 2147483648
        %v1144 = vor.u32 1.1754944e-38, %v1143
        %v1145 = vsel %vm1142, %v1144, %v1140
        %v1146 = vmul.f32 1.0, %v1145
        %v1147 = vmul.f32 %v1061, %v1131
        %v1148 = vmul.f32 %v1062, %v1146
        %v1149 = vld [vmem:[%s7] sm:$0xff]
        %v1150 = vld [vmem:[%s8] sm:$0xff]
        %1152 = vset.pattern.permute.xlu0 0
        %1153 = vperm.xlu0 %1152, %v1150
        %v1154 = vpop.permute.xlu0 %1153
        %vm1156 = vcmask 31744
        %v1158 = vsel %vm1156, %v1149, 0
        %v1161 = vsel %vm865, %v1147, 0
        %v1164 = vsel %vm865, %v1148, 0
        %1166 = vmatpush.msra.mxu0 0.0
        %1167 = vmatpush.msra.mxu0 0.0
        %1168 = vmatpush.msra.mxu0 0.0
        %1169 = vmatpush.msra.mxu0 0.0
        %1170 = vmatpush.msra.mxu0 0.0
        %1171 = vmatpush.msra.mxu0 0.0
        %1172 = vmatpush.msra.mxu0 0.0
        %1173 = vmatpush.msra.mxu0 0.0
        %1174 = vmatpush.msra.mxu0 0.0
        %1175 = vmatpush.msra.mxu0 0.0
        %1176 = vmatpush.msra.mxu0 0.0
        %1177 = vmatpush.msra.mxu0 0.0
        %1178 = vmatpush.msra.mxu0 0.0
        %1179 = vmatpush.msra.mxu0 0.0
        %1180 = vmatpush.msra.mxu0 0.0
        %1181 = vmatpush.msra.mxu0 %v1161
        %1182 = vmatmul.f32.gmra.mxu0 %v1158
        %v1183 = vpop.f32.mrf.mxu0
        %v1184 = vadd.f32 %v1154, %v1183
        %1185 = vdwg.mxu0
        %1186 = vmatpush.msra.mxu0 0.0
        %1187 = vmatpush.msra.mxu0 0.0
        %1188 = vmatpush.msra.mxu0 0.0
        %1189 = vmatpush.msra.mxu0 0.0
        %1190 = vmatpush.msra.mxu0 0.0
        %1191 = vmatpush.msra.mxu0 0.0
        %1192 = vmatpush.msra.mxu0 0.0
        %1193 = vmatpush.msra.mxu0 0.0
        %1194 = vmatpush.msra.mxu0 0.0
        %1195 = vmatpush.msra.mxu0 0.0
        %1196 = vmatpush.msra.mxu0 0.0
        %1197 = vmatpush.msra.mxu0 0.0
        %1198 = vmatpush.msra.mxu0 0.0
        %1199 = vmatpush.msra.mxu0 0.0
        %1200 = vmatpush.msra.mxu0 0.0
        %1201 = vmatpush.msra.mxu0 %v1164
        %1202 = vmatmul.f32.gmra.mxu0 %v1158
        %v1203 = vpop.f32.mrf.mxu0
        %v1204 = vadd.f32 %v1154, %v1203
        %1205 = vdwg.mxu0
        %1206 = vst [vmem:[%s636] sm:$0xff] %v1184
        %1207 = vst [vmem:[%s636 + $0x8] sm:$0xff] %v1204
        %1208 = vst [vmem:[%s636 + $0x10] sm:$0xff] %v700
        %1209 = vst [vmem:[%s636 + $0x18] sm:$0xff] %v701
        %s1210 = sand.u32 %s277, 1
        %s1211 = scalar_lea.sflag [#allocation4], %s1210
        %s1212 = sand.u32 %s277, 1
        %s1213 = smul.addr %s1212, 32
        %s1214 = scalar_lea.vmem [#allocation8], %s1213
        %s1215 = sand.u32 %s45, 1
        %s1216 = scalar_lea.sflag [#allocation10], %s1215
        %s1217 = sand.u32 %s305, 1
        %s1218 = smul.addr %s1217, 8
        %s1219 = scalar_lea.vmem [#allocation9], %s1218
        %s1220 = sand.u32 %s45, 1
        %s1221 = scalar_lea.sflag [#allocation10], %s1220
        %s1222 = sand.u32 %s333, 1
        %s1223 = smul.addr %s1222, 8
        %s1224 = scalar_lea.vmem [#allocation11], %s1223
        %s1225 = sand.u32 %s45, 1
        %s1226 = scalar_lea.sflag [#allocation13], %s1225
        %s1227 = sand.u32 %s361, 1
        %s1228 = smul.addr %s1227, 8
        %s1229 = scalar_lea.vmem [#allocation12], %s1228
        %s1230 = sand.u32 %s45, 1
        %s1231 = scalar_lea.sflag [#allocation13], %s1230
        %s1232 = sand.u32 %s389, 1
        %s1233 = smul.addr %s1232, 8
        %s1234 = scalar_lea.vmem [#allocation14], %s1233
        %s1235 = sand.u32 %s45, 1
        %s1236 = scalar_lea.sflag [#allocation16], %s1235
        %s1237 = sand.u32 %s417, 1
        %s1238 = smul.addr %s1237, 8
        %s1239 = scalar_lea.vmem [#allocation15], %s1238
        %s1240 = sand.u32 %s45, 1
        %s1241 = scalar_lea.sflag [#allocation16], %s1240
        %s1242 = sand.u32 %s445, 1
        %s1243 = smul.addr %s1242, 8
        %s1244 = scalar_lea.vmem [#allocation17], %s1243
        // Predicated region
        $region69: #{tpu_custom_call.1} parent=55 // pred_check
          %p1245 = pneg %p287
        $region70: #{tpu_custom_call.1} parent=55 // pred_check_branch
          %1247 = sbr.rel (%p1245) target = $region72
        $region71: #{tpu_custom_call.1} parent=55 // pred_region
          %s1248 = smul.u32 2, %s50
          %1250 = vsyncadd %s1211, 0
          %s1251 = smul.addr %s49, 4
          %s1252 = sadd.s32 %s1248, %s1251
          %s1253 = smul.addr %s1252, 8
          %s1254 = scalar_lea.hbm %s9, %s1253
          %s1255 = sshll.u32 %s1214, 4
          %s1256 = int_to_ptr.vmem [resolvable:$true] %s1255
          %s1257 = sshll.u32 %s1254, 4
          %s1258 = int_to_ptr.hbm [resolvable:$true] %s1257
          %1263 = dma.vmem_to_hbm [thread:$0]  %s1256, 512, %s1258, %s1211, 256, 256, 16
        $region72: #{tpu_custom_call.1} parent=55 // pred_fallthru
          _
        // Predicated region
        $region73: #{tpu_custom_call.1} parent=55 // pred_check
          %p1264 = pneg %p315
        $region74: #{tpu_custom_call.1} parent=55 // pred_check_branch
          %1266 = sbr.rel (%p1264) target = $region76
        $region75: #{tpu_custom_call.1} parent=55 // pred_region
          %s1267 = smul.u32 2, %s50
          %1269 = vsyncadd %s1216, 0
          %s1270 = smul.addr %s49, 2
          %s1271 = sadd.s32 %s1267, %s1270
          %s1272 = smul.addr %s1271, 4
          %s1273 = scalar_lea.hbm %s10, %s1272
          %s1275 = sshll.u32 %s1219, 4
          %s1276 = int_to_ptr.vmem [resolvable:$true] %s1275
          %s1277 = sshll.u32 %s1273, 4
          %s1278 = int_to_ptr.hbm [resolvable:$true] %s1277
          %1280 = dma.vmem_to_hbm [thread:$0]  %s1276, 128, %s1278, %s1216
        $region76: #{tpu_custom_call.1} parent=55 // pred_fallthru
          _
        // Predicated region
        $region77: #{tpu_custom_call.1} parent=55 // pred_check
          %p1281 = pneg %p343
        $region78: #{tpu_custom_call.1} parent=55 // pred_check_branch
          %1283 = sbr.rel (%p1281) target = $region80
        $region79: #{tpu_custom_call.1} parent=55 // pred_region
          %s1284 = smul.u32 2, %s50
          %1286 = vsyncadd %s1221, 0
          %s1287 = smul.addr %s49, 2
          %s1288 = sadd.s32 %s1284, %s1287
          %s1289 = smul.addr %s1288, 4
          %s1290 = scalar_lea.hbm %s11, %s1289
          %s1292 = sshll.u32 %s1224, 4
          %s1293 = int_to_ptr.vmem [resolvable:$true] %s1292
          %s1294 = sshll.u32 %s1290, 4
          %s1295 = int_to_ptr.hbm [resolvable:$true] %s1294
          %1297 = dma.vmem_to_hbm [thread:$0]  %s1293, 128, %s1295, %s1221
        $region80: #{tpu_custom_call.1} parent=55 // pred_fallthru
          _
        // Predicated region
        $region81: #{tpu_custom_call.1} parent=55 // pred_check
          %p1298 = pneg %p371
        $region82: #{tpu_custom_call.1} parent=55 // pred_check_branch
          %1300 = sbr.rel (%p1298) target = $region84
        $region83: #{tpu_custom_call.1} parent=55 // pred_region
          %s1301 = smul.u32 2, %s50
          %1303 = vsyncadd %s1226, 0
          %s1304 = smul.addr %s49, 2
          %s1305 = sadd.s32 %s1301, %s1304
          %s1306 = smul.addr %s1305, 4
          %s1307 = scalar_lea.hbm %s12, %s1306
          %s1309 = sshll.u32 %s1229, 4
          %s1310 = int_to_ptr.vmem [resolvable:$true] %s1309
          %s1311 = sshll.u32 %s1307, 4
          %s1312 = int_to_ptr.hbm [resolvable:$true] %s1311
          %1314 = dma.vmem_to_hbm [thread:$0]  %s1310, 128, %s1312, %s1226
        $region84: #{tpu_custom_call.1} parent=55 // pred_fallthru
          _
        // Predicated region
        $region85: #{tpu_custom_call.1} parent=55 // pred_check
          %p1315 = pneg %p399
        $region86: #{tpu_custom_call.1} parent=55 // pred_check_branch
          %1317 = sbr.rel (%p1315) target = $region88
        $region87: #{tpu_custom_call.1} parent=55 // pred_region
          %s1318 = smul.u32 2, %s50
          %1320 = vsyncadd %s1231, 0
          %s1321 = smul.addr %s49, 2
          %s1322 = sadd.s32 %s1318, %s1321
          %s1323 = smul.addr %s1322, 4
          %s1324 = scalar_lea.hbm %s13, %s1323
          %s1326 = sshll.u32 %s1234, 4
          %s1327 = int_to_ptr.vmem [resolvable:$true] %s1326
          %s1328 = sshll.u32 %s1324, 4
          %s1329 = int_to_ptr.hbm [resolvable:$true] %s1328
          %1331 = dma.vmem_to_hbm [thread:$0]  %s1327, 128, %s1329, %s1231
        $region88: #{tpu_custom_call.1} parent=55 // pred_fallthru
          _
        // Predicated region
        $region89: #{tpu_custom_call.1} parent=55 // pred_check
          %p1332 = pneg %p427
        $region90: #{tpu_custom_call.1} parent=55 // pred_check_branch
          %1334 = sbr.rel (%p1332) target = $region92
        $region91: #{tpu_custom_call.1} parent=55 // pred_region
          %s1335 = smul.u32 2, %s50
          %1337 = vsyncadd %s1236, 0
          %s1338 = smul.addr %s49, 2
          %s1339 = sadd.s32 %s1335, %s1338
          %s1340 = smul.addr %s1339, 4
          %s1341 = scalar_lea.hbm %s14, %s1340
          %s1343 = sshll.u32 %s1239, 4
          %s1344 = int_to_ptr.vmem [resolvable:$true] %s1343
          %s1345 = sshll.u32 %s1341, 4
          %s1346 = int_to_ptr.hbm [resolvable:$true] %s1345
          %1348 = dma.vmem_to_hbm [thread:$0]  %s1344, 128, %s1346, %s1236
        $region92: #{tpu_custom_call.1} parent=55 // pred_fallthru
          _
        // Predicated region
        $region93: #{tpu_custom_call.1} parent=55 // pred_check
          %p1349 = pneg %p455
        $region94: #{tpu_custom_call.1} parent=55 // pred_check_branch
          %1351 = sbr.rel (%p1349) target = $region96
        $region95: #{tpu_custom_call.1} parent=55 // pred_region
          %s1352 = smul.u32 2, %s50
          %1354 = vsyncadd %s1241, 0
          %s1355 = smul.addr %s49, 2
          %s1356 = sadd.s32 %s1352, %s1355
          %s1357 = smul.addr %s1356, 4
          %s1358 = scalar_lea.hbm %s15, %s1357
          %s1360 = sshll.u32 %s1244, 4
          %s1361 = int_to_ptr.vmem [resolvable:$true] %s1360
          %s1362 = sshll.u32 %s1358, 4
          %s1363 = int_to_ptr.hbm [resolvable:$true] %s1362
          %1365 = dma.vmem_to_hbm [thread:$0]  %s1361, 128, %s1363, %s1241
        $region96: #{tpu_custom_call.1} parent=55 // pred_fallthru
          _
      $region56: #{tpu_custom_call.1} parent=5 // pred_fallthru
        _
      %p1366 = scmp.le.s32.totalorder 2, %s40
      // Predicated region
      $region97: #{tpu_custom_call.1} parent=5 // pred_check
        %p1367 = pneg %p1366
      $region98: #{tpu_custom_call.1} parent=5 // pred_check_branch
        %1369 = sbr.rel (%p1367) target = $region100
      $region99: #{tpu_custom_call.1} parent=5 // pred_region
        %s1370 = ssub.s32 %s40, 2
        // Predicated region
        $region101: #{tpu_custom_call.1} parent=99 // pred_check
          %p1371 = pneg %p293
        $region102: #{tpu_custom_call.1} parent=99 // pred_check_branch
          %1373 = sbr.rel (%p1371) target = $region104
        $region103: #{tpu_custom_call.1} parent=99 // pred_region
          %s1374 = sand.u32 %s278, 1
          %s1375 = scalar_lea.sflag [#allocation4], %s1374
          %s1376 = sand.u32 %s278, 1
          %s1377 = smul.addr %s1376, 32
          %s1378 = scalar_lea.vmem [#allocation8], %s1377
          %1380 = dma.done %s1375, 512
        $region104: #{tpu_custom_call.1} parent=99 // pred_fallthru
          _
        // Predicated region
        $region105: #{tpu_custom_call.1} parent=99 // pred_check
          %p1381 = pneg %p321
        $region106: #{tpu_custom_call.1} parent=99 // pred_check_branch
          %1383 = sbr.rel (%p1381) target = $region108
        $region107: #{tpu_custom_call.1} parent=99 // pred_region
          %s1384 = sand.u32 %s46, 1
          %s1385 = scalar_lea.sflag [#allocation10], %s1384
          %s1386 = sand.u32 %s306, 1
          %s1387 = smul.addr %s1386, 8
          %s1388 = scalar_lea.vmem [#allocation9], %s1387
          %1390 = dma.done %s1385, 128
        $region108: #{tpu_custom_call.1} parent=99 // pred_fallthru
          _
        // Predicated region
        $region109: #{tpu_custom_call.1} parent=99 // pred_check
          %p1391 = pneg %p349
        $region110: #{tpu_custom_call.1} parent=99 // pred_check_branch
          %1393 = sbr.rel (%p1391) target = $region112
        $region111: #{tpu_custom_call.1} parent=99 // pred_region
          %s1394 = sand.u32 %s46, 1
          %s1395 = scalar_lea.sflag [#allocation10], %s1394
          %s1396 = sand.u32 %s334, 1
          %s1397 = smul.addr %s1396, 8
          %s1398 = scalar_lea.vmem [#allocation11], %s1397
          %1400 = dma.done %s1395, 128
        $region112: #{tpu_custom_call.1} parent=99 // pred_fallthru
          _
        // Predicated region
        $region113: #{tpu_custom_call.1} parent=99 // pred_check
          %p1401 = pneg %p377
        $region114: #{tpu_custom_call.1} parent=99 // pred_check_branch
          %1403 = sbr.rel (%p1401) target = $region116
        $region115: #{tpu_custom_call.1} parent=99 // pred_region
          %s1404 = sand.u32 %s46, 1
          %s1405 = scalar_lea.sflag [#allocation13], %s1404
          %s1406 = sand.u32 %s362, 1
          %s1407 = smul.addr %s1406, 8
          %s1408 = scalar_lea.vmem [#allocation12], %s1407
          %1410 = dma.done %s1405, 128
        $region116: #{tpu_custom_call.1} parent=99 // pred_fallthru
          _
        // Predicated region
        $region117: #{tpu_custom_call.1} parent=99 // pred_check
          %p1411 = pneg %p405
        $region118: #{tpu_custom_call.1} parent=99 // pred_check_branch
          %1413 = sbr.rel (%p1411) target = $region120
        $region119: #{tpu_custom_call.1} parent=99 // pred_region
          %s1414 = sand.u32 %s46, 1
          %s1415 = scalar_lea.sflag [#allocation13], %s1414
          %s1416 = sand.u32 %s390, 1
          %s1417 = smul.addr %s1416, 8
          %s1418 = scalar_lea.vmem [#allocation14], %s1417
          %1420 = dma.done %s1415, 128
        $region120: #{tpu_custom_call.1} parent=99 // pred_fallthru
          _
        // Predicated region
        $region121: #{tpu_custom_call.1} parent=99 // pred_check
          %p1421 = pneg %p433
        $region122: #{tpu_custom_call.1} parent=99 // pred_check_branch
          %1423 = sbr.rel (%p1421) target = $region124
        $region123: #{tpu_custom_call.1} parent=99 // pred_region
          %s1424 = sand.u32 %s46, 1
          %s1425 = scalar_lea.sflag [#allocation16], %s1424
          %s1426 = sand.u32 %s418, 1
          %s1427 = smul.addr %s1426, 8
          %s1428 = scalar_lea.vmem [#allocation15], %s1427
          %1430 = dma.done %s1425, 128
        $region124: #{tpu_custom_call.1} parent=99 // pred_fallthru
          _
        // Predicated region
        $region125: #{tpu_custom_call.1} parent=99 // pred_check
          %p1431 = pneg %p461
        $region126: #{tpu_custom_call.1} parent=99 // pred_check_branch
          %1433 = sbr.rel (%p1431) target = $region128
        $region127: #{tpu_custom_call.1} parent=99 // pred_region
          %s1434 = sand.u32 %s46, 1
          %s1435 = scalar_lea.sflag [#allocation16], %s1434
          %s1436 = sand.u32 %s446, 1
          %s1437 = smul.addr %s1436, 8
          %s1438 = scalar_lea.vmem [#allocation17], %s1437
          %1440 = dma.done %s1435, 128
        $region128: #{tpu_custom_call.1} parent=99 // pred_fallthru
          _
      $region100: #{tpu_custom_call.1} parent=5 // pred_fallthru
        _
    $region6: #{tpu_custom_call.1} parent=1 // loop_footer
      %s44 = sadd.s32 1, %s40
    $region7: #{tpu_custom_call.1} parent=1 // loop_footer_branch
      %39 = sbr.rel target = $region3
    $region8: #{tpu_custom_call.1} parent=1 // loop_exit
      _
    %1441 = vsyncpa [#allocation3], 1
    %s1442 = scalar_lea.sflag [#allocation3], 1
    %1443 = vsyncpa %s1442, 1
    %1444 = vsyncpa [#allocation6], 1
    %s1445 = scalar_lea.sflag [#allocation6], 1
    %1446 = vsyncpa %s1445, 1
    %1447 = vsyncpa [#allocation4], 1
    %s1448 = scalar_lea.sflag [#allocation4], 1
    %1449 = vsyncpa %s1448, 1
    %1450 = vsyncpa [#allocation10], 1
    %s1451 = scalar_lea.sflag [#allocation10], 1
    %1452 = vsyncpa %s1451, 1
    %1453 = vsyncpa [#allocation13], 1
    %s1454 = scalar_lea.sflag [#allocation13], 1
    %1455 = vsyncpa %s1454, 1
    %1456 = vsyncpa [#allocation16], 1
    %s1457 = scalar_lea.sflag [#allocation16], 1
    %1458 = vsyncpa %s1457, 1

</llo_original>
